<compile_context>
chip_gen: v5e
topology: v5e:2x2
jax: 0.10.0
libtpu: 0.0.40
codegen_flags: <defaults>
</compile_context>

<pallas_src>
import math

import jax
import jax.numpy as jnp
from jax.experimental import pallas as pl
from jax.experimental.pallas import tpu as pltpu

# ----------------------------- config --------------------------------------
B = 2          # batch
S_DEC = 8      # decoder sequence length
S_ENC = 8      # encoder sequence length
D_MODEL = 32   # model width
H = 4          # heads
D_K = D_MODEL // H
D_FF = 64      # feed-forward hidden width
EPS = 1e-5     # nn.LayerNorm default

R_DEC = B * S_DEC   # 16: decoder rows with batch folded into sublanes
R_ENC = B * S_ENC   # 16: encoder rows with batch folded into sublanes


# ----------------------------- kernel helpers --------------------------------
def _layer_norm(y, gamma, beta):
    """LayerNorm over the last dim.  y:[R,D] gamma/beta:[1,D]."""
    mu = jnp.mean(y, axis=-1, keepdims=True)
    var = jnp.mean(jnp.square(y - mu), axis=-1, keepdims=True)
    return (y - mu) * jax.lax.rsqrt(var + EPS) * gamma + beta


def _mha(q, k, v, bias, wo, bo, sk):
    """Multi-head attention over batch-folded rows.

    q:[B*S_DEC, D]  k,v:[B*sk, D]  bias:[B*S_DEC, sk] additive mask (0 / -1e9)
    wo:[D, D]  bo:[1, D]  ->  [B*S_DEC, D]

    Batches and heads are statically unrolled (trip counts 2 and 4).  Each
    (batch, head) output is lane-concatenated into a single [B*S_DEC, D]
    context, which is pushed through ONE wo matmul + one bias add instead of
    B*H tiny wo-slice matmuls and accumulation adds.
    """
    scale = 1.0 / math.sqrt(D_K)
    ctx_rows = []
    for b in range(B):
        qb = q[b * S_DEC:(b + 1) * S_DEC, :]            # [S_DEC, D]
        kb = k[b * sk:(b + 1) * sk, :]                  # [sk, D]
        vb = v[b * sk:(b + 1) * sk, :]                  # [sk, D]
        bias_b = bias[b * S_DEC:(b + 1) * S_DEC, :]     # [S_DEC, sk]
        heads = []
        for hd in range(H):
            lo = hd * D_K
            s = jnp.dot(qb[:, lo:lo + D_K], kb[:, lo:lo + D_K].T,
                        preferred_element_type=jnp.float32) * scale + bias_b
            m = jnp.max(s, axis=-1, keepdims=True)
            p = jnp.exp(s - m)
            # exact divide: Sk=8, the reciprocal is not on the critical path and
            # this keeps attention rows summing to 1 (tight tolerance vs ref).
            p = p / jnp.sum(p, axis=-1, keepdims=True)
            heads.append(jnp.dot(p, vb[:, lo:lo + D_K],
                                 preferred_element_type=jnp.float32))       # [S_DEC, dk]
        ctx_rows.append(jnp.concatenate(heads, axis=1))                     # [S_DEC, D]
    ctx = jnp.concatenate(ctx_rows, axis=0)                                 # [B*S_DEC, D]
    return jnp.dot(ctx, wo, preferred_element_type=jnp.float32) + bo


# ----------------------------- fused kernel ----------------------------------
def _decoder_layer_kernel(x_ref, mask_ref, w_ref, w2_ref, vec_ref, out_ref):
    """Entire decoder layer (all batches), fully resident in VMEM."""
    xd = x_ref[:R_DEC, :]          # [16, 32] decoder rows (batch folded)
    xe = x_ref[R_DEC:, :]          # [16, 32] encoder rows (batch folded)

    masks = mask_ref[...]          # [16, 16]
    tgt_bias = masks[:, :S_DEC]    # [16, 8] additive causal mask
    src_bias = masks[:, S_DEC:]    # [16, 8] additive source mask

    w = w_ref[...]                 # [32, 192]
    wqkv = w[:, :3 * D_MODEL]                       # [32, 96]  (wq | wk | wv)
    wo = w[:, 3 * D_MODEL:4 * D_MODEL]              # [32, 32]
    w1 = w[:, 4 * D_MODEL:]                         # [32, 64]
    w2 = w2_ref[...]                                # [64, 32]

    vec = vec_ref[...]             # [9, 128]
    bqkv = vec[0:1, :3 * D_MODEL]                   # [1, 96]  (bq | bk | bv)
    bo = vec[0:1, 3 * D_MODEL:4 * D_MODEL]          # [1, 32]
    b1 = vec[1:2, :D_FF]                            # [1, 64]
    b2 = vec[2:3, :D_MODEL]                         # [1, 32]
    g0, be0 = vec[3:4, :D_MODEL], vec[4:5, :D_MODEL]
    g1, be1 = vec[5:6, :D_MODEL], vec[6:7, :D_MODEL]
    g2, be2 = vec[7:8, :D_MODEL], vec[8:9, :D_MODEL]

    # -- self-attention: one fused [16,32] x [32,96] projection for all batches --
    qkv = jnp.dot(xd, wqkv, preferred_element_type=jnp.float32) + bqkv      # [16, 96]
    sa = _mha(qkv[:, :D_MODEL], qkv[:, D_MODEL:2 * D_MODEL], qkv[:, 2 * D_MODEL:],
              tgt_bias, wo, bo, S_DEC)
    a0 = _layer_norm(sa + xd, g0, be0)

    # -- cross-attention: SAME projection weights (as in the PyTorch module).
    #    q-proj(a0) and kv-proj(x_enc) fused into one stacked [32,32]x[32,96] matmul.
    stacked = jnp.concatenate([a0, xe], axis=0)                             # [32, 32]
    proj = jnp.dot(stacked, wqkv, preferred_element_type=jnp.float32) + bqkv  # [32, 96]
    q2 = proj[:R_DEC, :D_MODEL]
    k2 = proj[R_DEC:, D_MODEL:2 * D_MODEL]
    v2 = proj[R_DEC:, 2 * D_MODEL:]
    ca = _mha(q2, k2, v2, src_bias, wo, bo, S_ENC)
    a1 = _layer_norm(ca + a0, g1, be1)

    # -- feed-forward (all batches in one pass) --
    h1 = jnp.maximum(jnp.dot(a1, w1, preferred_element_type=jnp.float32) + b1, 0.0)
    ff = jnp.dot(h1, w2, preferred_element_type=jnp.float32) + b2

    out_ref[...] = _layer_norm(ff + a1, g2, be2).astype(out_ref.dtype)


# ----------------------------- wrapper ----------------------------------------
@jax.jit
def decoder_layer(x_dec, x_enc, tgt_mask, src_mask, params):
    b, sd, d = x_dec.shape
    se = x_enc.shape[1]
    p = params["attn"]                       # SAME weights for self- and cross-attn
    f = params["ffn"]

    # Weight slab [D, 3D + D + D_FF] = [32, 192]:  [wq | wk | wv | wo | w1]
    w_slab = jnp.concatenate([p["wq"], p["wk"], p["wv"], p["wo"], f["w1"]], axis=1)
    w2 = f["w2"]                                                   # [64, 32]

    # Vector slab [9, 4*D] = [9, 128]: one row per bias / LN parameter, lane-padded.
    width = 4 * D_MODEL

    def pad_row(v):
        return jnp.pad(v, ((0, 0), (0, width - v.shape[1])))

    rows = [jnp.concatenate([p["bq"], p["bk"], p["bv"], p["bo"]], axis=1),  # [1,128]
            pad_row(f["b1"]), pad_row(f["b2"])]
    for (g, be) in (params["ln0"], params["ln1"], params["ln2"]):
        rows.append(pad_row(g))
        rows.append(pad_row(be))
    vec_slab = jnp.concatenate(rows, axis=0)                       # [9, 128]

    # Fold batch into the sublane dimension; stack decoder + encoder rows.
    x_slab = jnp.concatenate([x_dec.reshape(b * sd, d),
                              x_enc.reshape(b * se, d)], axis=0)   # [32, 32]

    # Precompute ADDITIVE masks (0 where attended, -1e9 where masked) so the
    # kernel only does a single VPU add per score tile (no per-head compare/select).
    neg = jnp.float32(-1e9)
    tgt_bias = jnp.where(tgt_mask > 0, 0.0, neg).reshape(b * sd, sd)
    src_bias = jnp.where(src_mask > 0, 0.0, neg).reshape(b * sd, se)
    mask_slab = jnp.concatenate([tgt_bias, src_bias], axis=1)      # [16, 16]

    # NOTE: D_MODEL=32 < 128 forces a lane-masked output store; total output is
    # 2 KiB so this is noise (per performance review, left alone on purpose).
    out = pl.pallas_call(
        _decoder_layer_kernel,
        out_shape=jax.ShapeDtypeStruct((b * sd, d), x_dec.dtype),
        in_specs=[pl.BlockSpec(memory_space=pltpu.MemorySpace.VMEM)] * 5,
        out_specs=pl.BlockSpec(memory_space=pltpu.MemorySpace.VMEM),
    )(x_slab, mask_slab, w_slab, w2, vec_slab)
    return out.reshape(b, sd, d)


# ----------------------------- pure-JAX reference ----------------------------
def _ref_mha(x_q, x_kv, mask, p):
    q = x_q @ p["wq"] + p["bq"]
    k = x_kv @ p["wk"] + p["bk"]
    v = x_kv @ p["wv"] + p["bv"]
    bq_, sq, _ = q.shape
    sk = k.shape[1]
    qh = q.reshape(bq_, sq, H, D_K).transpose(0, 2, 1, 3)
    kh = k.reshape(bq_, sk, H, D_K).transpose(0, 2, 1, 3)
    vh = v.reshape(bq_, sk, H, D_K).transpose(0, 2, 1, 3)
    s = jnp.einsum("bhqd,bhkd->bhqk", qh, kh) / math.sqrt(D_K)
    s = jnp.where(mask[:, None, :, :] > 0, s, -1e9)
    p_attn = jax.nn.softmax(s, axis=-1)
    o = jnp.einsum("bhqk,bhkd->bhqd", p_attn, vh)
    o = o.transpose(0, 2, 1, 3).reshape(bq_, sq, D_MODEL)
    return o @ p["wo"] + p["bo"]


def _ref_addnorm(x, res, gamma, beta):
    y = x + res
    mu = jnp.mean(y, axis=-1, keepdims=True)
    var = jnp.mean(jnp.square(y - mu), axis=-1, keepdims=True)
    return (y - mu) * jax.lax.rsqrt(var + EPS) * gamma + beta


def _ref_decoder_layer(x_dec, x_enc, tgt_mask, src_mask, params):
    a = _ref_mha(x_dec, x_dec, tgt_mask, params["attn"])
    a0 = _ref_addnorm(a, x_dec, *params["ln0"])
    c = _ref_mha(a0, x_enc, src_mask, params["attn"])
    a1 = _ref_addnorm(c, a0, *params["ln1"])
    f = params["ffn"]
    ff = jnp.maximum(a1 @ f["w1"] + f["b1"], 0.0) @ f["w2"] + f["b2"]
    return _ref_addnorm(ff, a1, *params["ln2"])


# ----------------------------- param init ------------------------------------
def init_params(key):
    ks = jax.random.split(key, 12)
    scale = 0.05

    def lin(k, fan_in, fan_out):
        return scale * jax.random.normal(k, (fan_in, fan_out), jnp.float32)

    attn = {
        "wq": lin(ks[0], D_MODEL, D_MODEL), "bq": jnp.zeros((1, D_MODEL), jnp.float32),
        "wk": lin(ks[1], D_MODEL, D_MODEL), "bk": jnp.zeros((1, D_MODEL), jnp.float32),
        "wv": lin(ks[2], D_MODEL, D_MODEL), "bv": jnp.zeros((1, D_MODEL), jnp.float32),
        "wo": lin(ks[3], D_MODEL, D_MODEL), "bo": jnp.zeros((1, D_MODEL), jnp.float32),
    }
    ffn = {
        "w1": lin(ks[4], D_MODEL, D_FF), "b1": 0.01 * jnp.ones((1, D_FF), jnp.float32),
        "w2": lin(ks[5], D_FF, D_MODEL), "b2": 0.01 * jnp.ones((1, D_MODEL), jnp.float32),
    }

    def ln():
        return (jnp.ones((1, D_MODEL), jnp.float32), jnp.zeros((1, D_MODEL), jnp.float32))

    return {"attn": attn, "ffn": ffn, "ln0": ln(), "ln1": ln(), "ln2": ln()}


# ----------------------------- main -------------------------------------------
if __name__ == "__main__":
    key = jax.random.PRNGKey(0)
    k_x, k_e, k_p = jax.random.split(key, 3)

    x_dec = jax.random.normal(k_x, (B, S_DEC, D_MODEL), jnp.float32)
    x_enc = jax.random.normal(k_e, (B, S_ENC, D_MODEL), jnp.float32)

    # causal target mask; full source mask (any 0/1 mask is supported)
    causal = jnp.tril(jnp.ones((S_DEC, S_DEC), jnp.float32))
    tgt_mask = jnp.broadcast_to(causal, (B, S_DEC, S_DEC))
    src_mask = jnp.ones((B, S_DEC, S_ENC), jnp.float32)

    params = init_params(k_p)

    out = decoder_layer(x_dec, x_enc, tgt_mask, src_mask, params)
    out = jax.block_until_ready(out)

    ref = _ref_decoder_layer(x_dec, x_enc, tgt_mask, src_mask, params)
    assert out.shape == (B, S_DEC, D_MODEL)
    # Exact softmax divide + f32 matmuls -> tight tolerance restored.
    assert jnp.allclose(out, ref, atol=1e-4, rtol=1e-4), (
        f"max abs err {jnp.max(jnp.abs(out - ref))}")

    print("KERNEL_OK")
</pallas_src>

<mosaic_0001>
module attributes {stable_mosaic.version = 11 : i64} {
  func.func @_decoder_layer_kernel(%arg0: memref<32x32xf32, #tpu.memory_space<vmem>>, %arg1: memref<16x16xf32, #tpu.memory_space<vmem>>, %arg2: memref<32x192xf32, #tpu.memory_space<vmem>>, %arg3: memref<64x32xf32, #tpu.memory_space<vmem>>, %arg4: memref<9x128xf32, #tpu.memory_space<vmem>>, %arg5: memref<16x32xf32, #tpu.memory_space<vmem>>) attributes {dimension_semantics = [], scalar_prefetch = 0 : i64, scratch_operands = 0 : i64, tpu.core_type = #tpu.core_type<tc>} {
    %c0 = arith.constant 0 : index
    %c0_0 = arith.constant 0 : index
    %0 = vector.load %arg0[%c0, %c0_0] : memref<32x32xf32, #tpu.memory_space<vmem>>, vector<16x32xf32>
    %c16 = arith.constant 16 : index
    %c0_1 = arith.constant 0 : index
    %1 = vector.load %arg0[%c16, %c0_1] : memref<32x32xf32, #tpu.memory_space<vmem>>, vector<16x32xf32>
    %c0_2 = arith.constant 0 : index
    %c0_3 = arith.constant 0 : index
    %2 = vector.load %arg1[%c0_2, %c0_3] : memref<16x16xf32, #tpu.memory_space<vmem>>, vector<16x16xf32>
    %3 = vector.extract_strided_slice %2 {offsets = [0, 0], sizes = [16, 8], strides = [1, 1]} : vector<16x16xf32> to vector<16x8xf32>
    %4 = vector.extract_strided_slice %2 {offsets = [0, 8], sizes = [16, 8], strides = [1, 1]} : vector<16x16xf32> to vector<16x8xf32>
    %c0_4 = arith.constant 0 : index
    %c0_5 = arith.constant 0 : index
    %5 = vector.load %arg2[%c0_4, %c0_5] : memref<32x192xf32, #tpu.memory_space<vmem>>, vector<32x192xf32>
    %6 = vector.extract_strided_slice %5 {offsets = [0, 0], sizes = [32, 96], strides = [1, 1]} : vector<32x192xf32> to vector<32x96xf32>
    %7 = vector.extract_strided_slice %5 {offsets = [0, 96], sizes = [32, 32], strides = [1, 1]} : vector<32x192xf32> to vector<32x32xf32>
    %8 = vector.extract_strided_slice %5 {offsets = [0, 128], sizes = [32, 64], strides = [1, 1]} : vector<32x192xf32> to vector<32x64xf32>
    %c0_6 = arith.constant 0 : index
    %c0_7 = arith.constant 0 : index
    %9 = vector.load %arg3[%c0_6, %c0_7] : memref<64x32xf32, #tpu.memory_space<vmem>>, vector<64x32xf32>
    %c0_8 = arith.constant 0 : index
    %c0_9 = arith.constant 0 : index
    %10 = vector.load %arg4[%c0_8, %c0_9] : memref<9x128xf32, #tpu.memory_space<vmem>>, vector<9x128xf32>
    %11 = vector.extract_strided_slice %10 {offsets = [0, 0], sizes = [1, 96], strides = [1, 1]} : vector<9x128xf32> to vector<1x96xf32>
    %12 = vector.extract_strided_slice %10 {offsets = [0, 96], sizes = [1, 32], strides = [1, 1]} : vector<9x128xf32> to vector<1x32xf32>
    %13 = vector.extract_strided_slice %10 {offsets = [1, 0], sizes = [1, 64], strides = [1, 1]} : vector<9x128xf32> to vector<1x64xf32>
    %14 = vector.extract_strided_slice %10 {offsets = [2, 0], sizes = [1, 32], strides = [1, 1]} : vector<9x128xf32> to vector<1x32xf32>
    %15 = vector.extract_strided_slice %10 {offsets = [3, 0], sizes = [1, 32], strides = [1, 1]} : vector<9x128xf32> to vector<1x32xf32>
    %16 = vector.extract_strided_slice %10 {offsets = [4, 0], sizes = [1, 32], strides = [1, 1]} : vector<9x128xf32> to vector<1x32xf32>
    %17 = vector.extract_strided_slice %10 {offsets = [5, 0], sizes = [1, 32], strides = [1, 1]} : vector<9x128xf32> to vector<1x32xf32>
    %18 = vector.extract_strided_slice %10 {offsets = [6, 0], sizes = [1, 32], strides = [1, 1]} : vector<9x128xf32> to vector<1x32xf32>
    %19 = vector.extract_strided_slice %10 {offsets = [7, 0], sizes = [1, 32], strides = [1, 1]} : vector<9x128xf32> to vector<1x32xf32>
    %20 = vector.extract_strided_slice %10 {offsets = [8, 0], sizes = [1, 32], strides = [1, 1]} : vector<9x128xf32> to vector<1x32xf32>
    %cst = arith.constant dense<0.000000e+00> : vector<16x96xf32>
    %21 = tpu.matmul %0, %6, %cst {dimension_numbers = #tpu.dot_dimension_numbers<[1], [0], [0], [1], [0, 0, 1, 1], [], []>} : vector<16x32xf32>, vector<32x96xf32>, vector<16x96xf32> -> vector<16x96xf32>
    %22 = vector.broadcast %11 : vector<1x96xf32> to vector<16x96xf32>
    %23 = arith.addf %21, %22 : vector<16x96xf32>
    %24 = vector.extract_strided_slice %23 {offsets = [0, 0], sizes = [16, 32], strides = [1, 1]} : vector<16x96xf32> to vector<16x32xf32>
    %25 = vector.extract_strided_slice %23 {offsets = [0, 32], sizes = [16, 32], strides = [1, 1]} : vector<16x96xf32> to vector<16x32xf32>
    %26 = vector.extract_strided_slice %23 {offsets = [0, 64], sizes = [16, 32], strides = [1, 1]} : vector<16x96xf32> to vector<16x32xf32>
    %27 = vector.extract_strided_slice %24 {offsets = [0, 0], sizes = [8, 32], strides = [1, 1]} : vector<16x32xf32> to vector<8x32xf32>
    %28 = vector.extract_strided_slice %25 {offsets = [0, 0], sizes = [8, 32], strides = [1, 1]} : vector<16x32xf32> to vector<8x32xf32>
    %29 = vector.extract_strided_slice %26 {offsets = [0, 0], sizes = [8, 32], strides = [1, 1]} : vector<16x32xf32> to vector<8x32xf32>
    %30 = vector.extract_strided_slice %3 {offsets = [0, 0], sizes = [8, 8], strides = [1, 1]} : vector<16x8xf32> to vector<8x8xf32>
    %31 = vector.extract_strided_slice %27 {offsets = [0, 0], sizes = [8, 8], strides = [1, 1]} : vector<8x32xf32> to vector<8x8xf32>
    %32 = vector.extract_strided_slice %28 {offsets = [0, 0], sizes = [8, 8], strides = [1, 1]} : vector<8x32xf32> to vector<8x8xf32>
    %33 = tpu.transpose %32, [1, 0] : vector<8x8xf32> -> vector<8x8xf32>
    %cst_10 = arith.constant dense<0.000000e+00> : vector<8x8xf32>
    %34 = tpu.matmul %31, %33, %cst_10 {dimension_numbers = #tpu.dot_dimension_numbers<[1], [0], [0], [1], [0, 0, 1, 1], [], []>} : vector<8x8xf32>, vector<8x8xf32>, vector<8x8xf32> -> vector<8x8xf32>
    %cst_11 = arith.constant 0.353553385 : f32
    %35 = vector.broadcast %cst_11 : f32 to vector<8x8xf32>
    %36 = arith.mulf %34, %35 : vector<8x8xf32>
    %37 = arith.addf %36, %30 : vector<8x8xf32>
    %cst_12 = arith.constant dense<0xFF800000> : vector<8xf32>
    %38 = vector.multi_reduction <maximumf>, %37, %cst_12 [1] : vector<8x8xf32> to vector<8xf32>
    %39 = vector.shape_cast %38 : vector<8xf32> to vector<8x1xf32>
    %40 = vector.broadcast %39 : vector<8x1xf32> to vector<8x8xf32>
    %41 = arith.subf %37, %40 : vector<8x8xf32>
    %42 = math.exp %41 : vector<8x8xf32>
    %cst_13 = arith.constant dense<0.000000e+00> : vector<8xf32>
    %43 = vector.multi_reduction <add>, %42, %cst_13 [1] : vector<8x8xf32> to vector<8xf32>
    %44 = vector.shape_cast %43 : vector<8xf32> to vector<8x1xf32>
    %45 = vector.broadcast %44 : vector<8x1xf32> to vector<8x8xf32>
    %46 = arith.divf %42, %45 : vector<8x8xf32>
    %47 = vector.extract_strided_slice %29 {offsets = [0, 0], sizes = [8, 8], strides = [1, 1]} : vector<8x32xf32> to vector<8x8xf32>
    %cst_14 = arith.constant dense<0.000000e+00> : vector<8x8xf32>
    %48 = tpu.matmul %46, %47, %cst_14 {dimension_numbers = #tpu.dot_dimension_numbers<[1], [0], [0], [1], [0, 0, 1, 1], [], []>} : vector<8x8xf32>, vector<8x8xf32>, vector<8x8xf32> -> vector<8x8xf32>
    %49 = vector.extract_strided_slice %27 {offsets = [0, 8], sizes = [8, 8], strides = [1, 1]} : vector<8x32xf32> to vector<8x8xf32>
    %50 = vector.extract_strided_slice %28 {offsets = [0, 8], sizes = [8, 8], strides = [1, 1]} : vector<8x32xf32> to vector<8x8xf32>
    %51 = tpu.transpose %50, [1, 0] : vector<8x8xf32> -> vector<8x8xf32>
    %cst_15 = arith.constant dense<0.000000e+00> : vector<8x8xf32>
    %52 = tpu.matmul %49, %51, %cst_15 {dimension_numbers = #tpu.dot_dimension_numbers<[1], [0], [0], [1], [0, 0, 1, 1], [], []>} : vector<8x8xf32>, vector<8x8xf32>, vector<8x8xf32> -> vector<8x8xf32>
    %cst_16 = arith.constant 0.353553385 : f32
    %53 = vector.broadcast %cst_16 : f32 to vector<8x8xf32>
    %54 = arith.mulf %52, %53 : vector<8x8xf32>
    %55 = arith.addf %54, %30 : vector<8x8xf32>
    %cst_17 = arith.constant dense<0xFF800000> : vector<8xf32>
    %56 = vector.multi_reduction <maximumf>, %55, %cst_17 [1] : vector<8x8xf32> to vector<8xf32>
    %57 = vector.shape_cast %56 : vector<8xf32> to vector<8x1xf32>
    %58 = vector.broadcast %57 : vector<8x1xf32> to vector<8x8xf32>
    %59 = arith.subf %55, %58 : vector<8x8xf32>
    %60 = math.exp %59 : vector<8x8xf32>
    %cst_18 = arith.constant dense<0.000000e+00> : vector<8xf32>
    %61 = vector.multi_reduction <add>, %60, %cst_18 [1] : vector<8x8xf32> to vector<8xf32>
    %62 = vector.shape_cast %61 : vector<8xf32> to vector<8x1xf32>
    %63 = vector.broadcast %62 : vector<8x1xf32> to vector<8x8xf32>
    %64 = arith.divf %60, %63 : vector<8x8xf32>
    %65 = vector.extract_strided_slice %29 {offsets = [0, 8], sizes = [8, 8], strides = [1, 1]} : vector<8x32xf32> to vector<8x8xf32>
    %cst_19 = arith.constant dense<0.000000e+00> : vector<8x8xf32>
    %66 = tpu.matmul %64, %65, %cst_19 {dimension_numbers = #tpu.dot_dimension_numbers<[1], [0], [0], [1], [0, 0, 1, 1], [], []>} : vector<8x8xf32>, vector<8x8xf32>, vector<8x8xf32> -> vector<8x8xf32>
    %67 = vector.extract_strided_slice %27 {offsets = [0, 16], sizes = [8, 8], strides = [1, 1]} : vector<8x32xf32> to vector<8x8xf32>
    %68 = vector.extract_strided_slice %28 {offsets = [0, 16], sizes = [8, 8], strides = [1, 1]} : vector<8x32xf32> to vector<8x8xf32>
    %69 = tpu.transpose %68, [1, 0] : vector<8x8xf32> -> vector<8x8xf32>
    %cst_20 = arith.constant dense<0.000000e+00> : vector<8x8xf32>
    %70 = tpu.matmul %67, %69, %cst_20 {dimension_numbers = #tpu.dot_dimension_numbers<[1], [0], [0], [1], [0, 0, 1, 1], [], []>} : vector<8x8xf32>, vector<8x8xf32>, vector<8x8xf32> -> vector<8x8xf32>
    %cst_21 = arith.constant 0.353553385 : f32
    %71 = vector.broadcast %cst_21 : f32 to vector<8x8xf32>
    %72 = arith.mulf %70, %71 : vector<8x8xf32>
    %73 = arith.addf %72, %30 : vector<8x8xf32>
    %cst_22 = arith.constant dense<0xFF800000> : vector<8xf32>
    %74 = vector.multi_reduction <maximumf>, %73, %cst_22 [1] : vector<8x8xf32> to vector<8xf32>
    %75 = vector.shape_cast %74 : vector<8xf32> to vector<8x1xf32>
    %76 = vector.broadcast %75 : vector<8x1xf32> to vector<8x8xf32>
    %77 = arith.subf %73, %76 : vector<8x8xf32>
    %78 = math.exp %77 : vector<8x8xf32>
    %cst_23 = arith.constant dense<0.000000e+00> : vector<8xf32>
    %79 = vector.multi_reduction <add>, %78, %cst_23 [1] : vector<8x8xf32> to vector<8xf32>
    %80 = vector.shape_cast %79 : vector<8xf32> to vector<8x1xf32>
    %81 = vector.broadcast %80 : vector<8x1xf32> to vector<8x8xf32>
    %82 = arith.divf %78, %81 : vector<8x8xf32>
    %83 = vector.extract_strided_slice %29 {offsets = [0, 16], sizes = [8, 8], strides = [1, 1]} : vector<8x32xf32> to vector<8x8xf32>
    %cst_24 = arith.constant dense<0.000000e+00> : vector<8x8xf32>
    %84 = tpu.matmul %82, %83, %cst_24 {dimension_numbers = #tpu.dot_dimension_numbers<[1], [0], [0], [1], [0, 0, 1, 1], [], []>} : vector<8x8xf32>, vector<8x8xf32>, vector<8x8xf32> -> vector<8x8xf32>
    %85 = vector.extract_strided_slice %27 {offsets = [0, 24], sizes = [8, 8], strides = [1, 1]} : vector<8x32xf32> to vector<8x8xf32>
    %86 = vector.extract_strided_slice %28 {offsets = [0, 24], sizes = [8, 8], strides = [1, 1]} : vector<8x32xf32> to vector<8x8xf32>
    %87 = tpu.transpose %86, [1, 0] : vector<8x8xf32> -> vector<8x8xf32>
    %cst_25 = arith.constant dense<0.000000e+00> : vector<8x8xf32>
    %88 = tpu.matmul %85, %87, %cst_25 {dimension_numbers = #tpu.dot_dimension_numbers<[1], [0], [0], [1], [0, 0, 1, 1], [], []>} : vector<8x8xf32>, vector<8x8xf32>, vector<8x8xf32> -> vector<8x8xf32>
    %cst_26 = arith.constant 0.353553385 : f32
    %89 = vector.broadcast %cst_26 : f32 to vector<8x8xf32>
    %90 = arith.mulf %88, %89 : vector<8x8xf32>
    %91 = arith.addf %90, %30 : vector<8x8xf32>
    %cst_27 = arith.constant dense<0xFF800000> : vector<8xf32>
    %92 = vector.multi_reduction <maximumf>, %91, %cst_27 [1] : vector<8x8xf32> to vector<8xf32>
    %93 = vector.shape_cast %92 : vector<8xf32> to vector<8x1xf32>
    %94 = vector.broadcast %93 : vector<8x1xf32> to vector<8x8xf32>
    %95 = arith.subf %91, %94 : vector<8x8xf32>
    %96 = math.exp %95 : vector<8x8xf32>
    %cst_28 = arith.constant dense<0.000000e+00> : vector<8xf32>
    %97 = vector.multi_reduction <add>, %96, %cst_28 [1] : vector<8x8xf32> to vector<8xf32>
    %98 = vector.shape_cast %97 : vector<8xf32> to vector<8x1xf32>
    %99 = vector.broadcast %98 : vector<8x1xf32> to vector<8x8xf32>
    %100 = arith.divf %96, %99 : vector<8x8xf32>
    %101 = vector.extract_strided_slice %29 {offsets = [0, 24], sizes = [8, 8], strides = [1, 1]} : vector<8x32xf32> to vector<8x8xf32>
    %cst_29 = arith.constant dense<0.000000e+00> : vector<8x8xf32>
    %102 = tpu.matmul %100, %101, %cst_29 {dimension_numbers = #tpu.dot_dimension_numbers<[1], [0], [0], [1], [0, 0, 1, 1], [], []>} : vector<8x8xf32>, vector<8x8xf32>, vector<8x8xf32> -> vector<8x8xf32>
    %103 = tpu.concatenate %48, %66, %84, %102 in 1 : vector<8x8xf32>, vector<8x8xf32>, vector<8x8xf32>, vector<8x8xf32> -> vector<8x32xf32>
    %104 = vector.extract_strided_slice %24 {offsets = [8, 0], sizes = [8, 32], strides = [1, 1]} : vector<16x32xf32> to vector<8x32xf32>
    %105 = vector.extract_strided_slice %25 {offsets = [8, 0], sizes = [8, 32], strides = [1, 1]} : vector<16x32xf32> to vector<8x32xf32>
    %106 = vector.extract_strided_slice %26 {offsets = [8, 0], sizes = [8, 32], strides = [1, 1]} : vector<16x32xf32> to vector<8x32xf32>
    %107 = vector.extract_strided_slice %3 {offsets = [8, 0], sizes = [8, 8], strides = [1, 1]} : vector<16x8xf32> to vector<8x8xf32>
    %108 = vector.extract_strided_slice %104 {offsets = [0, 0], sizes = [8, 8], strides = [1, 1]} : vector<8x32xf32> to vector<8x8xf32>
    %109 = vector.extract_strided_slice %105 {offsets = [0, 0], sizes = [8, 8], strides = [1, 1]} : vector<8x32xf32> to vector<8x8xf32>
    %110 = tpu.transpose %109, [1, 0] : vector<8x8xf32> -> vector<8x8xf32>
    %cst_30 = arith.constant dense<0.000000e+00> : vector<8x8xf32>
    %111 = tpu.matmul %108, %110, %cst_30 {dimension_numbers = #tpu.dot_dimension_numbers<[1], [0], [0], [1], [0, 0, 1, 1], [], []>} : vector<8x8xf32>, vector<8x8xf32>, vector<8x8xf32> -> vector<8x8xf32>
    %cst_31 = arith.constant 0.353553385 : f32
    %112 = vector.broadcast %cst_31 : f32 to vector<8x8xf32>
    %113 = arith.mulf %111, %112 : vector<8x8xf32>
    %114 = arith.addf %113, %107 : vector<8x8xf32>
    %cst_32 = arith.constant dense<0xFF800000> : vector<8xf32>
    %115 = vector.multi_reduction <maximumf>, %114, %cst_32 [1] : vector<8x8xf32> to vector<8xf32>
    %116 = vector.shape_cast %115 : vector<8xf32> to vector<8x1xf32>
    %117 = vector.broadcast %116 : vector<8x1xf32> to vector<8x8xf32>
    %118 = arith.subf %114, %117 : vector<8x8xf32>
    %119 = math.exp %118 : vector<8x8xf32>
    %cst_33 = arith.constant dense<0.000000e+00> : vector<8xf32>
    %120 = vector.multi_reduction <add>, %119, %cst_33 [1] : vector<8x8xf32> to vector<8xf32>
    %121 = vector.shape_cast %120 : vector<8xf32> to vector<8x1xf32>
    %122 = vector.broadcast %121 : vector<8x1xf32> to vector<8x8xf32>
    %123 = arith.divf %119, %122 : vector<8x8xf32>
    %124 = vector.extract_strided_slice %106 {offsets = [0, 0], sizes = [8, 8], strides = [1, 1]} : vector<8x32xf32> to vector<8x8xf32>
    %cst_34 = arith.constant dense<0.000000e+00> : vector<8x8xf32>
    %125 = tpu.matmul %123, %124, %cst_34 {dimension_numbers = #tpu.dot_dimension_numbers<[1], [0], [0], [1], [0, 0, 1, 1], [], []>} : vector<8x8xf32>, vector<8x8xf32>, vector<8x8xf32> -> vector<8x8xf32>
    %126 = vector.extract_strided_slice %104 {offsets = [0, 8], sizes = [8, 8], strides = [1, 1]} : vector<8x32xf32> to vector<8x8xf32>
    %127 = vector.extract_strided_slice %105 {offsets = [0, 8], sizes = [8, 8], strides = [1, 1]} : vector<8x32xf32> to vector<8x8xf32>
    %128 = tpu.transpose %127, [1, 0] : vector<8x8xf32> -> vector<8x8xf32>
    %cst_35 = arith.constant dense<0.000000e+00> : vector<8x8xf32>
    %129 = tpu.matmul %126, %128, %cst_35 {dimension_numbers = #tpu.dot_dimension_numbers<[1], [0], [0], [1], [0, 0, 1, 1], [], []>} : vector<8x8xf32>, vector<8x8xf32>, vector<8x8xf32> -> vector<8x8xf32>
    %cst_36 = arith.constant 0.353553385 : f32
    %130 = vector.broadcast %cst_36 : f32 to vector<8x8xf32>
    %131 = arith.mulf %129, %130 : vector<8x8xf32>
    %132 = arith.addf %131, %107 : vector<8x8xf32>
    %cst_37 = arith.constant dense<0xFF800000> : vector<8xf32>
    %133 = vector.multi_reduction <maximumf>, %132, %cst_37 [1] : vector<8x8xf32> to vector<8xf32>
    %134 = vector.shape_cast %133 : vector<8xf32> to vector<8x1xf32>
    %135 = vector.broadcast %134 : vector<8x1xf32> to vector<8x8xf32>
    %136 = arith.subf %132, %135 : vector<8x8xf32>
    %137 = math.exp %136 : vector<8x8xf32>
    %cst_38 = arith.constant dense<0.000000e+00> : vector<8xf32>
    %138 = vector.multi_reduction <add>, %137, %cst_38 [1] : vector<8x8xf32> to vector<8xf32>
    %139 = vector.shape_cast %138 : vector<8xf32> to vector<8x1xf32>
    %140 = vector.broadcast %139 : vector<8x1xf32> to vector<8x8xf32>
    %141 = arith.divf %137, %140 : vector<8x8xf32>
    %142 = vector.extract_strided_slice %106 {offsets = [0, 8], sizes = [8, 8], strides = [1, 1]} : vector<8x32xf32> to vector<8x8xf32>
    %cst_39 = arith.constant dense<0.000000e+00> : vector<8x8xf32>
    %143 = tpu.matmul %141, %142, %cst_39 {dimension_numbers = #tpu.dot_dimension_numbers<[1], [0], [0], [1], [0, 0, 1, 1], [], []>} : vector<8x8xf32>, vector<8x8xf32>, vector<8x8xf32> -> vector<8x8xf32>
    %144 = vector.extract_strided_slice %104 {offsets = [0, 16], sizes = [8, 8], strides = [1, 1]} : vector<8x32xf32> to vector<8x8xf32>
    %145 = vector.extract_strided_slice %105 {offsets = [0, 16], sizes = [8, 8], strides = [1, 1]} : vector<8x32xf32> to vector<8x8xf32>
    %146 = tpu.transpose %145, [1, 0] : vector<8x8xf32> -> vector<8x8xf32>
    %cst_40 = arith.constant dense<0.000000e+00> : vector<8x8xf32>
    %147 = tpu.matmul %144, %146, %cst_40 {dimension_numbers = #tpu.dot_dimension_numbers<[1], [0], [0], [1], [0, 0, 1, 1], [], []>} : vector<8x8xf32>, vector<8x8xf32>, vector<8x8xf32> -> vector<8x8xf32>
    %cst_41 = arith.constant 0.353553385 : f32
    %148 = vector.broadcast %cst_41 : f32 to vector<8x8xf32>
    %149 = arith.mulf %147, %148 : vector<8x8xf32>
    %150 = arith.addf %149, %107 : vector<8x8xf32>
    %cst_42 = arith.constant dense<0xFF800000> : vector<8xf32>
    %151 = vector.multi_reduction <maximumf>, %150, %cst_42 [1] : vector<8x8xf32> to vector<8xf32>
    %152 = vector.shape_cast %151 : vector<8xf32> to vector<8x1xf32>
    %153 = vector.broadcast %152 : vector<8x1xf32> to vector<8x8xf32>
    %154 = arith.subf %150, %153 : vector<8x8xf32>
    %155 = math.exp %154 : vector<8x8xf32>
    %cst_43 = arith.constant dense<0.000000e+00> : vector<8xf32>
    %156 = vector.multi_reduction <add>, %155, %cst_43 [1] : vector<8x8xf32> to vector<8xf32>
    %157 = vector.shape_cast %156 : vector<8xf32> to vector<8x1xf32>
    %158 = vector.broadcast %157 : vector<8x1xf32> to vector<8x8xf32>
    %159 = arith.divf %155, %158 : vector<8x8xf32>
    %160 = vector.extract_strided_slice %106 {offsets = [0, 16], sizes = [8, 8], strides = [1, 1]} : vector<8x32xf32> to vector<8x8xf32>
    %cst_44 = arith.constant dense<0.000000e+00> : vector<8x8xf32>
    %161 = tpu.matmul %159, %160, %cst_44 {dimension_numbers = #tpu.dot_dimension_numbers<[1], [0], [0], [1], [0, 0, 1, 1], [], []>} : vector<8x8xf32>, vector<8x8xf32>, vector<8x8xf32> -> vector<8x8xf32>
    %162 = vector.extract_strided_slice %104 {offsets = [0, 24], sizes = [8, 8], strides = [1, 1]} : vector<8x32xf32> to vector<8x8xf32>
    %163 = vector.extract_strided_slice %105 {offsets = [0, 24], sizes = [8, 8], strides = [1, 1]} : vector<8x32xf32> to vector<8x8xf32>
    %164 = tpu.transpose %163, [1, 0] : vector<8x8xf32> -> vector<8x8xf32>
    %cst_45 = arith.constant dense<0.000000e+00> : vector<8x8xf32>
    %165 = tpu.matmul %162, %164, %cst_45 {dimension_numbers = #tpu.dot_dimension_numbers<[1], [0], [0], [1], [0, 0, 1, 1], [], []>} : vector<8x8xf32>, vector<8x8xf32>, vector<8x8xf32> -> vector<8x8xf32>
    %cst_46 = arith.constant 0.353553385 : f32
    %166 = vector.broadcast %cst_46 : f32 to vector<8x8xf32>
    %167 = arith.mulf %165, %166 : vector<8x8xf32>
    %168 = arith.addf %167, %107 : vector<8x8xf32>
    %cst_47 = arith.constant dense<0xFF800000> : vector<8xf32>
    %169 = vector.multi_reduction <maximumf>, %168, %cst_47 [1] : vector<8x8xf32> to vector<8xf32>
    %170 = vector.shape_cast %169 : vector<8xf32> to vector<8x1xf32>
    %171 = vector.broadcast %170 : vector<8x1xf32> to vector<8x8xf32>
    %172 = arith.subf %168, %171 : vector<8x8xf32>
    %173 = math.exp %172 : vector<8x8xf32>
    %cst_48 = arith.constant dense<0.000000e+00> : vector<8xf32>
    %174 = vector.multi_reduction <add>, %173, %cst_48 [1] : vector<8x8xf32> to vector<8xf32>
    %175 = vector.shape_cast %174 : vector<8xf32> to vector<8x1xf32>
    %176 = vector.broadcast %175 : vector<8x1xf32> to vector<8x8xf32>
    %177 = arith.divf %173, %176 : vector<8x8xf32>
    %178 = vector.extract_strided_slice %106 {offsets = [0, 24], sizes = [8, 8], strides = [1, 1]} : vector<8x32xf32> to vector<8x8xf32>
    %cst_49 = arith.constant dense<0.000000e+00> : vector<8x8xf32>
    %179 = tpu.matmul %177, %178, %cst_49 {dimension_numbers = #tpu.dot_dimension_numbers<[1], [0], [0], [1], [0, 0, 1, 1], [], []>} : vector<8x8xf32>, vector<8x8xf32>, vector<8x8xf32> -> vector<8x8xf32>
    %180 = tpu.concatenate %125, %143, %161, %179 in 1 : vector<8x8xf32>, vector<8x8xf32>, vector<8x8xf32>, vector<8x8xf32> -> vector<8x32xf32>
    %181 = tpu.concatenate %103, %180 in 0 : vector<8x32xf32>, vector<8x32xf32> -> vector<16x32xf32>
    %cst_50 = arith.constant dense<0.000000e+00> : vector<16x32xf32>
    %182 = tpu.matmul %181, %7, %cst_50 {dimension_numbers = #tpu.dot_dimension_numbers<[1], [0], [0], [1], [0, 0, 1, 1], [], []>} : vector<16x32xf32>, vector<32x32xf32>, vector<16x32xf32> -> vector<16x32xf32>
    %183 = vector.broadcast %12 : vector<1x32xf32> to vector<16x32xf32>
    %184 = arith.addf %182, %183 : vector<16x32xf32>
    %185 = arith.addf %184, %0 : vector<16x32xf32>
    %cst_51 = arith.constant dense<0.000000e+00> : vector<16xf32>
    %186 = vector.multi_reduction <add>, %185, %cst_51 [1] : vector<16x32xf32> to vector<16xf32>
    %187 = vector.shape_cast %186 : vector<16xf32> to vector<16x1xf32>
    %cst_52 = arith.constant 3.200000e+01 : f32
    %188 = vector.broadcast %cst_52 : f32 to vector<16x1xf32>
    %189 = arith.divf %187, %188 : vector<16x1xf32>
    %190 = vector.broadcast %189 : vector<16x1xf32> to vector<16x32xf32>
    %191 = arith.subf %185, %190 : vector<16x32xf32>
    %192 = arith.mulf %191, %191 : vector<16x32xf32>
    %cst_53 = arith.constant dense<0.000000e+00> : vector<16xf32>
    %193 = vector.multi_reduction <add>, %192, %cst_53 [1] : vector<16x32xf32> to vector<16xf32>
    %194 = vector.shape_cast %193 : vector<16xf32> to vector<16x1xf32>
    %cst_54 = arith.constant 3.200000e+01 : f32
    %195 = vector.broadcast %cst_54 : f32 to vector<16x1xf32>
    %196 = arith.divf %194, %195 : vector<16x1xf32>
    %197 = vector.broadcast %189 : vector<16x1xf32> to vector<16x32xf32>
    %198 = arith.subf %185, %197 : vector<16x32xf32>
    %cst_55 = arith.constant 9.99999974E-6 : f32
    %199 = vector.broadcast %cst_55 : f32 to vector<16x1xf32>
    %200 = arith.addf %196, %199 : vector<16x1xf32>
    %201 = math.rsqrt %200 : vector<16x1xf32>
    %202 = vector.broadcast %201 : vector<16x1xf32> to vector<16x32xf32>
    %203 = arith.mulf %198, %202 : vector<16x32xf32>
    %204 = vector.broadcast %15 : vector<1x32xf32> to vector<16x32xf32>
    %205 = arith.mulf %203, %204 : vector<16x32xf32>
    %206 = vector.broadcast %16 : vector<1x32xf32> to vector<16x32xf32>
    %207 = arith.addf %205, %206 : vector<16x32xf32>
    %208 = tpu.concatenate %207, %1 in 0 : vector<16x32xf32>, vector<16x32xf32> -> vector<32x32xf32>
    %cst_56 = arith.constant dense<0.000000e+00> : vector<32x96xf32>
    %209 = tpu.matmul %208, %6, %cst_56 {dimension_numbers = #tpu.dot_dimension_numbers<[1], [0], [0], [1], [0, 0, 1, 1], [], []>} : vector<32x32xf32>, vector<32x96xf32>, vector<32x96xf32> -> vector<32x96xf32>
    %210 = vector.broadcast %11 : vector<1x96xf32> to vector<32x96xf32>
    %211 = arith.addf %209, %210 : vector<32x96xf32>
    %212 = vector.extract_strided_slice %211 {offsets = [0, 0], sizes = [16, 32], strides = [1, 1]} : vector<32x96xf32> to vector<16x32xf32>
    %213 = vector.extract_strided_slice %211 {offsets = [16, 32], sizes = [16, 32], strides = [1, 1]} : vector<32x96xf32> to vector<16x32xf32>
    %214 = vector.extract_strided_slice %211 {offsets = [16, 64], sizes = [16, 32], strides = [1, 1]} : vector<32x96xf32> to vector<16x32xf32>
    %215 = vector.extract_strided_slice %212 {offsets = [0, 0], sizes = [8, 32], strides = [1, 1]} : vector<16x32xf32> to vector<8x32xf32>
    %216 = vector.extract_strided_slice %213 {offsets = [0, 0], sizes = [8, 32], strides = [1, 1]} : vector<16x32xf32> to vector<8x32xf32>
    %217 = vector.extract_strided_slice %214 {offsets = [0, 0], sizes = [8, 32], strides = [1, 1]} : vector<16x32xf32> to vector<8x32xf32>
    %218 = vector.extract_strided_slice %4 {offsets = [0, 0], sizes = [8, 8], strides = [1, 1]} : vector<16x8xf32> to vector<8x8xf32>
    %219 = vector.extract_strided_slice %215 {offsets = [0, 0], sizes = [8, 8], strides = [1, 1]} : vector<8x32xf32> to vector<8x8xf32>
    %220 = vector.extract_strided_slice %216 {offsets = [0, 0], sizes = [8, 8], strides = [1, 1]} : vector<8x32xf32> to vector<8x8xf32>
    %221 = tpu.transpose %220, [1, 0] : vector<8x8xf32> -> vector<8x8xf32>
    %cst_57 = arith.constant dense<0.000000e+00> : vector<8x8xf32>
    %222 = tpu.matmul %219, %221, %cst_57 {dimension_numbers = #tpu.dot_dimension_numbers<[1], [0], [0], [1], [0, 0, 1, 1], [], []>} : vector<8x8xf32>, vector<8x8xf32>, vector<8x8xf32> -> vector<8x8xf32>
    %cst_58 = arith.constant 0.353553385 : f32
    %223 = vector.broadcast %cst_58 : f32 to vector<8x8xf32>
    %224 = arith.mulf %222, %223 : vector<8x8xf32>
    %225 = arith.addf %224, %218 : vector<8x8xf32>
    %cst_59 = arith.constant dense<0xFF800000> : vector<8xf32>
    %226 = vector.multi_reduction <maximumf>, %225, %cst_59 [1] : vector<8x8xf32> to vector<8xf32>
    %227 = vector.shape_cast %226 : vector<8xf32> to vector<8x1xf32>
    %228 = vector.broadcast %227 : vector<8x1xf32> to vector<8x8xf32>
    %229 = arith.subf %225, %228 : vector<8x8xf32>
    %230 = math.exp %229 : vector<8x8xf32>
    %cst_60 = arith.constant dense<0.000000e+00> : vector<8xf32>
    %231 = vector.multi_reduction <add>, %230, %cst_60 [1] : vector<8x8xf32> to vector<8xf32>
    %232 = vector.shape_cast %231 : vector<8xf32> to vector<8x1xf32>
    %233 = vector.broadcast %232 : vector<8x1xf32> to vector<8x8xf32>
    %234 = arith.divf %230, %233 : vector<8x8xf32>
    %235 = vector.extract_strided_slice %217 {offsets = [0, 0], sizes = [8, 8], strides = [1, 1]} : vector<8x32xf32> to vector<8x8xf32>
    %cst_61 = arith.constant dense<0.000000e+00> : vector<8x8xf32>
    %236 = tpu.matmul %234, %235, %cst_61 {dimension_numbers = #tpu.dot_dimension_numbers<[1], [0], [0], [1], [0, 0, 1, 1], [], []>} : vector<8x8xf32>, vector<8x8xf32>, vector<8x8xf32> -> vector<8x8xf32>
    %237 = vector.extract_strided_slice %215 {offsets = [0, 8], sizes = [8, 8], strides = [1, 1]} : vector<8x32xf32> to vector<8x8xf32>
    %238 = vector.extract_strided_slice %216 {offsets = [0, 8], sizes = [8, 8], strides = [1, 1]} : vector<8x32xf32> to vector<8x8xf32>
    %239 = tpu.transpose %238, [1, 0] : vector<8x8xf32> -> vector<8x8xf32>
    %cst_62 = arith.constant dense<0.000000e+00> : vector<8x8xf32>
    %240 = tpu.matmul %237, %239, %cst_62 {dimension_numbers = #tpu.dot_dimension_numbers<[1], [0], [0], [1], [0, 0, 1, 1], [], []>} : vector<8x8xf32>, vector<8x8xf32>, vector<8x8xf32> -> vector<8x8xf32>
    %cst_63 = arith.constant 0.353553385 : f32
    %241 = vector.broadcast %cst_63 : f32 to vector<8x8xf32>
    %242 = arith.mulf %240, %241 : vector<8x8xf32>
    %243 = arith.addf %242, %218 : vector<8x8xf32>
    %cst_64 = arith.constant dense<0xFF800000> : vector<8xf32>
    %244 = vector.multi_reduction <maximumf>, %243, %cst_64 [1] : vector<8x8xf32> to vector<8xf32>
    %245 = vector.shape_cast %244 : vector<8xf32> to vector<8x1xf32>
    %246 = vector.broadcast %245 : vector<8x1xf32> to vector<8x8xf32>
    %247 = arith.subf %243, %246 : vector<8x8xf32>
    %248 = math.exp %247 : vector<8x8xf32>
    %cst_65 = arith.constant dense<0.000000e+00> : vector<8xf32>
    %249 = vector.multi_reduction <add>, %248, %cst_65 [1] : vector<8x8xf32> to vector<8xf32>
    %250 = vector.shape_cast %249 : vector<8xf32> to vector<8x1xf32>
    %251 = vector.broadcast %250 : vector<8x1xf32> to vector<8x8xf32>
    %252 = arith.divf %248, %251 : vector<8x8xf32>
    %253 = vector.extract_strided_slice %217 {offsets = [0, 8], sizes = [8, 8], strides = [1, 1]} : vector<8x32xf32> to vector<8x8xf32>
    %cst_66 = arith.constant dense<0.000000e+00> : vector<8x8xf32>
    %254 = tpu.matmul %252, %253, %cst_66 {dimension_numbers = #tpu.dot_dimension_numbers<[1], [0], [0], [1], [0, 0, 1, 1], [], []>} : vector<8x8xf32>, vector<8x8xf32>, vector<8x8xf32> -> vector<8x8xf32>
    %255 = vector.extract_strided_slice %215 {offsets = [0, 16], sizes = [8, 8], strides = [1, 1]} : vector<8x32xf32> to vector<8x8xf32>
    %256 = vector.extract_strided_slice %216 {offsets = [0, 16], sizes = [8, 8], strides = [1, 1]} : vector<8x32xf32> to vector<8x8xf32>
    %257 = tpu.transpose %256, [1, 0] : vector<8x8xf32> -> vector<8x8xf32>
    %cst_67 = arith.constant dense<0.000000e+00> : vector<8x8xf32>
    %258 = tpu.matmul %255, %257, %cst_67 {dimension_numbers = #tpu.dot_dimension_numbers<[1], [0], [0], [1], [0, 0, 1, 1], [], []>} : vector<8x8xf32>, vector<8x8xf32>, vector<8x8xf32> -> vector<8x8xf32>
    %cst_68 = arith.constant 0.353553385 : f32
    %259 = vector.broadcast %cst_68 : f32 to vector<8x8xf32>
    %260 = arith.mulf %258, %259 : vector<8x8xf32>
    %261 = arith.addf %260, %218 : vector<8x8xf32>
    %cst_69 = arith.constant dense<0xFF800000> : vector<8xf32>
    %262 = vector.multi_reduction <maximumf>, %261, %cst_69 [1] : vector<8x8xf32> to vector<8xf32>
    %263 = vector.shape_cast %262 : vector<8xf32> to vector<8x1xf32>
    %264 = vector.broadcast %263 : vector<8x1xf32> to vector<8x8xf32>
    %265 = arith.subf %261, %264 : vector<8x8xf32>
    %266 = math.exp %265 : vector<8x8xf32>
    %cst_70 = arith.constant dense<0.000000e+00> : vector<8xf32>
    %267 = vector.multi_reduction <add>, %266, %cst_70 [1] : vector<8x8xf32> to vector<8xf32>
    %268 = vector.shape_cast %267 : vector<8xf32> to vector<8x1xf32>
    %269 = vector.broadcast %268 : vector<8x1xf32> to vector<8x8xf32>
    %270 = arith.divf %266, %269 : vector<8x8xf32>
    %271 = vector.extract_strided_slice %217 {offsets = [0, 16], sizes = [8, 8], strides = [1, 1]} : vector<8x32xf32> to vector<8x8xf32>
    %cst_71 = arith.constant dense<0.000000e+00> : vector<8x8xf32>
    %272 = tpu.matmul %270, %271, %cst_71 {dimension_numbers = #tpu.dot_dimension_numbers<[1], [0], [0], [1], [0, 0, 1, 1], [], []>} : vector<8x8xf32>, vector<8x8xf32>, vector<8x8xf32> -> vector<8x8xf32>
    %273 = vector.extract_strided_slice %215 {offsets = [0, 24], sizes = [8, 8], strides = [1, 1]} : vector<8x32xf32> to vector<8x8xf32>
    %274 = vector.extract_strided_slice %216 {offsets = [0, 24], sizes = [8, 8], strides = [1, 1]} : vector<8x32xf32> to vector<8x8xf32>
    %275 = tpu.transpose %274, [1, 0] : vector<8x8xf32> -> vector<8x8xf32>
    %cst_72 = arith.constant dense<0.000000e+00> : vector<8x8xf32>
    %276 = tpu.matmul %273, %275, %cst_72 {dimension_numbers = #tpu.dot_dimension_numbers<[1], [0], [0], [1], [0, 0, 1, 1], [], []>} : vector<8x8xf32>, vector<8x8xf32>, vector<8x8xf32> -> vector<8x8xf32>
    %cst_73 = arith.constant 0.353553385 : f32
    %277 = vector.broadcast %cst_73 : f32 to vector<8x8xf32>
    %278 = arith.mulf %276, %277 : vector<8x8xf32>
    %279 = arith.addf %278, %218 : vector<8x8xf32>
    %cst_74 = arith.constant dense<0xFF800000> : vector<8xf32>
    %280 = vector.multi_reduction <maximumf>, %279, %cst_74 [1] : vector<8x8xf32> to vector<8xf32>
    %281 = vector.shape_cast %280 : vector<8xf32> to vector<8x1xf32>
    %282 = vector.broadcast %281 : vector<8x1xf32> to vector<8x8xf32>
    %283 = arith.subf %279, %282 : vector<8x8xf32>
    %284 = math.exp %283 : vector<8x8xf32>
    %cst_75 = arith.constant dense<0.000000e+00> : vector<8xf32>
    %285 = vector.multi_reduction <add>, %284, %cst_75 [1] : vector<8x8xf32> to vector<8xf32>
    %286 = vector.shape_cast %285 : vector<8xf32> to vector<8x1xf32>
    %287 = vector.broadcast %286 : vector<8x1xf32> to vector<8x8xf32>
    %288 = arith.divf %284, %287 : vector<8x8xf32>
    %289 = vector.extract_strided_slice %217 {offsets = [0, 24], sizes = [8, 8], strides = [1, 1]} : vector<8x32xf32> to vector<8x8xf32>
    %cst_76 = arith.constant dense<0.000000e+00> : vector<8x8xf32>
    %290 = tpu.matmul %288, %289, %cst_76 {dimension_numbers = #tpu.dot_dimension_numbers<[1], [0], [0], [1], [0, 0, 1, 1], [], []>} : vector<8x8xf32>, vector<8x8xf32>, vector<8x8xf32> -> vector<8x8xf32>
    %291 = tpu.concatenate %236, %254, %272, %290 in 1 : vector<8x8xf32>, vector<8x8xf32>, vector<8x8xf32>, vector<8x8xf32> -> vector<8x32xf32>
    %292 = vector.extract_strided_slice %212 {offsets = [8, 0], sizes = [8, 32], strides = [1, 1]} : vector<16x32xf32> to vector<8x32xf32>
    %293 = vector.extract_strided_slice %213 {offsets = [8, 0], sizes = [8, 32], strides = [1, 1]} : vector<16x32xf32> to vector<8x32xf32>
    %294 = vector.extract_strided_slice %214 {offsets = [8, 0], sizes = [8, 32], strides = [1, 1]} : vector<16x32xf32> to vector<8x32xf32>
    %295 = vector.extract_strided_slice %4 {offsets = [8, 0], sizes = [8, 8], strides = [1, 1]} : vector<16x8xf32> to vector<8x8xf32>
    %296 = vector.extract_strided_slice %292 {offsets = [0, 0], sizes = [8, 8], strides = [1, 1]} : vector<8x32xf32> to vector<8x8xf32>
    %297 = vector.extract_strided_slice %293 {offsets = [0, 0], sizes = [8, 8], strides = [1, 1]} : vector<8x32xf32> to vector<8x8xf32>
    %298 = tpu.transpose %297, [1, 0] : vector<8x8xf32> -> vector<8x8xf32>
    %cst_77 = arith.constant dense<0.000000e+00> : vector<8x8xf32>
    %299 = tpu.matmul %296, %298, %cst_77 {dimension_numbers = #tpu.dot_dimension_numbers<[1], [0], [0], [1], [0, 0, 1, 1], [], []>} : vector<8x8xf32>, vector<8x8xf32>, vector<8x8xf32> -> vector<8x8xf32>
    %cst_78 = arith.constant 0.353553385 : f32
    %300 = vector.broadcast %cst_78 : f32 to vector<8x8xf32>
    %301 = arith.mulf %299, %300 : vector<8x8xf32>
    %302 = arith.addf %301, %295 : vector<8x8xf32>
    %cst_79 = arith.constant dense<0xFF800000> : vector<8xf32>
    %303 = vector.multi_reduction <maximumf>, %302, %cst_79 [1] : vector<8x8xf32> to vector<8xf32>
    %304 = vector.shape_cast %303 : vector<8xf32> to vector<8x1xf32>
    %305 = vector.broadcast %304 : vector<8x1xf32> to vector<8x8xf32>
    %306 = arith.subf %302, %305 : vector<8x8xf32>
    %307 = math.exp %306 : vector<8x8xf32>
    %cst_80 = arith.constant dense<0.000000e+00> : vector<8xf32>
    %308 = vector.multi_reduction <add>, %307, %cst_80 [1] : vector<8x8xf32> to vector<8xf32>
    %309 = vector.shape_cast %308 : vector<8xf32> to vector<8x1xf32>
    %310 = vector.broadcast %309 : vector<8x1xf32> to vector<8x8xf32>
    %311 = arith.divf %307, %310 : vector<8x8xf32>
    %312 = vector.extract_strided_slice %294 {offsets = [0, 0], sizes = [8, 8], strides = [1, 1]} : vector<8x32xf32> to vector<8x8xf32>
    %cst_81 = arith.constant dense<0.000000e+00> : vector<8x8xf32>
    %313 = tpu.matmul %311, %312, %cst_81 {dimension_numbers = #tpu.dot_dimension_numbers<[1], [0], [0], [1], [0, 0, 1, 1], [], []>} : vector<8x8xf32>, vector<8x8xf32>, vector<8x8xf32> -> vector<8x8xf32>
    %314 = vector.extract_strided_slice %292 {offsets = [0, 8], sizes = [8, 8], strides = [1, 1]} : vector<8x32xf32> to vector<8x8xf32>
    %315 = vector.extract_strided_slice %293 {offsets = [0, 8], sizes = [8, 8], strides = [1, 1]} : vector<8x32xf32> to vector<8x8xf32>
    %316 = tpu.transpose %315, [1, 0] : vector<8x8xf32> -> vector<8x8xf32>
    %cst_82 = arith.constant dense<0.000000e+00> : vector<8x8xf32>
    %317 = tpu.matmul %314, %316, %cst_82 {dimension_numbers = #tpu.dot_dimension_numbers<[1], [0], [0], [1], [0, 0, 1, 1], [], []>} : vector<8x8xf32>, vector<8x8xf32>, vector<8x8xf32> -> vector<8x8xf32>
    %cst_83 = arith.constant 0.353553385 : f32
    %318 = vector.broadcast %cst_83 : f32 to vector<8x8xf32>
    %319 = arith.mulf %317, %318 : vector<8x8xf32>
    %320 = arith.addf %319, %295 : vector<8x8xf32>
    %cst_84 = arith.constant dense<0xFF800000> : vector<8xf32>
    %321 = vector.multi_reduction <maximumf>, %320, %cst_84 [1] : vector<8x8xf32> to vector<8xf32>
    %322 = vector.shape_cast %321 : vector<8xf32> to vector<8x1xf32>
    %323 = vector.broadcast %322 : vector<8x1xf32> to vector<8x8xf32>
    %324 = arith.subf %320, %323 : vector<8x8xf32>
    %325 = math.exp %324 : vector<8x8xf32>
    %cst_85 = arith.constant dense<0.000000e+00> : vector<8xf32>
    %326 = vector.multi_reduction <add>, %325, %cst_85 [1] : vector<8x8xf32> to vector<8xf32>
    %327 = vector.shape_cast %326 : vector<8xf32> to vector<8x1xf32>
    %328 = vector.broadcast %327 : vector<8x1xf32> to vector<8x8xf32>
    %329 = arith.divf %325, %328 : vector<8x8xf32>
    %330 = vector.extract_strided_slice %294 {offsets = [0, 8], sizes = [8, 8], strides = [1, 1]} : vector<8x32xf32> to vector<8x8xf32>
    %cst_86 = arith.constant dense<0.000000e+00> : vector<8x8xf32>
    %331 = tpu.matmul %329, %330, %cst_86 {dimension_numbers = #tpu.dot_dimension_numbers<[1], [0], [0], [1], [0, 0, 1, 1], [], []>} : vector<8x8xf32>, vector<8x8xf32>, vector<8x8xf32> -> vector<8x8xf32>
    %332 = vector.extract_strided_slice %292 {offsets = [0, 16], sizes = [8, 8], strides = [1, 1]} : vector<8x32xf32> to vector<8x8xf32>
    %333 = vector.extract_strided_slice %293 {offsets = [0, 16], sizes = [8, 8], strides = [1, 1]} : vector<8x32xf32> to vector<8x8xf32>
    %334 = tpu.transpose %333, [1, 0] : vector<8x8xf32> -> vector<8x8xf32>
    %cst_87 = arith.constant dense<0.000000e+00> : vector<8x8xf32>
    %335 = tpu.matmul %332, %334, %cst_87 {dimension_numbers = #tpu.dot_dimension_numbers<[1], [0], [0], [1], [0, 0, 1, 1], [], []>} : vector<8x8xf32>, vector<8x8xf32>, vector<8x8xf32> -> vector<8x8xf32>
    %cst_88 = arith.constant 0.353553385 : f32
    %336 = vector.broadcast %cst_88 : f32 to vector<8x8xf32>
    %337 = arith.mulf %335, %336 : vector<8x8xf32>
    %338 = arith.addf %337, %295 : vector<8x8xf32>
    %cst_89 = arith.constant dense<0xFF800000> : vector<8xf32>
    %339 = vector.multi_reduction <maximumf>, %338, %cst_89 [1] : vector<8x8xf32> to vector<8xf32>
    %340 = vector.shape_cast %339 : vector<8xf32> to vector<8x1xf32>
    %341 = vector.broadcast %340 : vector<8x1xf32> to vector<8x8xf32>
    %342 = arith.subf %338, %341 : vector<8x8xf32>
    %343 = math.exp %342 : vector<8x8xf32>
    %cst_90 = arith.constant dense<0.000000e+00> : vector<8xf32>
    %344 = vector.multi_reduction <add>, %343, %cst_90 [1] : vector<8x8xf32> to vector<8xf32>
    %345 = vector.shape_cast %344 : vector<8xf32> to vector<8x1xf32>
    %346 = vector.broadcast %345 : vector<8x1xf32> to vector<8x8xf32>
    %347 = arith.divf %343, %346 : vector<8x8xf32>
    %348 = vector.extract_strided_slice %294 {offsets = [0, 16], sizes = [8, 8], strides = [1, 1]} : vector<8x32xf32> to vector<8x8xf32>
    %cst_91 = arith.constant dense<0.000000e+00> : vector<8x8xf32>
    %349 = tpu.matmul %347, %348, %cst_91 {dimension_numbers = #tpu.dot_dimension_numbers<[1], [0], [0], [1], [0, 0, 1, 1], [], []>} : vector<8x8xf32>, vector<8x8xf32>, vector<8x8xf32> -> vector<8x8xf32>
    %350 = vector.extract_strided_slice %292 {offsets = [0, 24], sizes = [8, 8], strides = [1, 1]} : vector<8x32xf32> to vector<8x8xf32>
    %351 = vector.extract_strided_slice %293 {offsets = [0, 24], sizes = [8, 8], strides = [1, 1]} : vector<8x32xf32> to vector<8x8xf32>
    %352 = tpu.transpose %351, [1, 0] : vector<8x8xf32> -> vector<8x8xf32>
    %cst_92 = arith.constant dense<0.000000e+00> : vector<8x8xf32>
    %353 = tpu.matmul %350, %352, %cst_92 {dimension_numbers = #tpu.dot_dimension_numbers<[1], [0], [0], [1], [0, 0, 1, 1], [], []>} : vector<8x8xf32>, vector<8x8xf32>, vector<8x8xf32> -> vector<8x8xf32>
    %cst_93 = arith.constant 0.353553385 : f32
    %354 = vector.broadcast %cst_93 : f32 to vector<8x8xf32>
    %355 = arith.mulf %353, %354 : vector<8x8xf32>
    %356 = arith.addf %355, %295 : vector<8x8xf32>
    %cst_94 = arith.constant dense<0xFF800000> : vector<8xf32>
    %357 = vector.multi_reduction <maximumf>, %356, %cst_94 [1] : vector<8x8xf32> to vector<8xf32>
    %358 = vector.shape_cast %357 : vector<8xf32> to vector<8x1xf32>
    %359 = vector.broadcast %358 : vector<8x1xf32> to vector<8x8xf32>
    %360 = arith.subf %356, %359 : vector<8x8xf32>
    %361 = math.exp %360 : vector<8x8xf32>
    %cst_95 = arith.constant dense<0.000000e+00> : vector<8xf32>
    %362 = vector.multi_reduction <add>, %361, %cst_95 [1] : vector<8x8xf32> to vector<8xf32>
    %363 = vector.shape_cast %362 : vector<8xf32> to vector<8x1xf32>
    %364 = vector.broadcast %363 : vector<8x1xf32> to vector<8x8xf32>
    %365 = arith.divf %361, %364 : vector<8x8xf32>
    %366 = vector.extract_strided_slice %294 {offsets = [0, 24], sizes = [8, 8], strides = [1, 1]} : vector<8x32xf32> to vector<8x8xf32>
    %cst_96 = arith.constant dense<0.000000e+00> : vector<8x8xf32>
    %367 = tpu.matmul %365, %366, %cst_96 {dimension_numbers = #tpu.dot_dimension_numbers<[1], [0], [0], [1], [0, 0, 1, 1], [], []>} : vector<8x8xf32>, vector<8x8xf32>, vector<8x8xf32> -> vector<8x8xf32>
    %368 = tpu.concatenate %313, %331, %349, %367 in 1 : vector<8x8xf32>, vector<8x8xf32>, vector<8x8xf32>, vector<8x8xf32> -> vector<8x32xf32>
    %369 = tpu.concatenate %291, %368 in 0 : vector<8x32xf32>, vector<8x32xf32> -> vector<16x32xf32>
    %cst_97 = arith.constant dense<0.000000e+00> : vector<16x32xf32>
    %370 = tpu.matmul %369, %7, %cst_97 {dimension_numbers = #tpu.dot_dimension_numbers<[1], [0], [0], [1], [0, 0, 1, 1], [], []>} : vector<16x32xf32>, vector<32x32xf32>, vector<16x32xf32> -> vector<16x32xf32>
    %371 = vector.broadcast %12 : vector<1x32xf32> to vector<16x32xf32>
    %372 = arith.addf %370, %371 : vector<16x32xf32>
    %373 = arith.addf %372, %207 : vector<16x32xf32>
    %cst_98 = arith.constant dense<0.000000e+00> : vector<16xf32>
    %374 = vector.multi_reduction <add>, %373, %cst_98 [1] : vector<16x32xf32> to vector<16xf32>
    %375 = vector.shape_cast %374 : vector<16xf32> to vector<16x1xf32>
    %cst_99 = arith.constant 3.200000e+01 : f32
    %376 = vector.broadcast %cst_99 : f32 to vector<16x1xf32>
    %377 = arith.divf %375, %376 : vector<16x1xf32>
    %378 = vector.broadcast %377 : vector<16x1xf32> to vector<16x32xf32>
    %379 = arith.subf %373, %378 : vector<16x32xf32>
    %380 = arith.mulf %379, %379 : vector<16x32xf32>
    %cst_100 = arith.constant dense<0.000000e+00> : vector<16xf32>
    %381 = vector.multi_reduction <add>, %380, %cst_100 [1] : vector<16x32xf32> to vector<16xf32>
    %382 = vector.shape_cast %381 : vector<16xf32> to vector<16x1xf32>
    %cst_101 = arith.constant 3.200000e+01 : f32
    %383 = vector.broadcast %cst_101 : f32 to vector<16x1xf32>
    %384 = arith.divf %382, %383 : vector<16x1xf32>
    %385 = vector.broadcast %377 : vector<16x1xf32> to vector<16x32xf32>
    %386 = arith.subf %373, %385 : vector<16x32xf32>
    %cst_102 = arith.constant 9.99999974E-6 : f32
    %387 = vector.broadcast %cst_102 : f32 to vector<16x1xf32>
    %388 = arith.addf %384, %387 : vector<16x1xf32>
    %389 = math.rsqrt %388 : vector<16x1xf32>
    %390 = vector.broadcast %389 : vector<16x1xf32> to vector<16x32xf32>
    %391 = arith.mulf %386, %390 : vector<16x32xf32>
    %392 = vector.broadcast %17 : vector<1x32xf32> to vector<16x32xf32>
    %393 = arith.mulf %391, %392 : vector<16x32xf32>
    %394 = vector.broadcast %18 : vector<1x32xf32> to vector<16x32xf32>
    %395 = arith.addf %393, %394 : vector<16x32xf32>
    %cst_103 = arith.constant dense<0.000000e+00> : vector<16x64xf32>
    %396 = tpu.matmul %395, %8, %cst_103 {dimension_numbers = #tpu.dot_dimension_numbers<[1], [0], [0], [1], [0, 0, 1, 1], [], []>} : vector<16x32xf32>, vector<32x64xf32>, vector<16x64xf32> -> vector<16x64xf32>
    %397 = vector.broadcast %13 : vector<1x64xf32> to vector<16x64xf32>
    %398 = arith.addf %396, %397 : vector<16x64xf32>
    %cst_104 = arith.constant 0.000000e+00 : f32
    %399 = vector.broadcast %cst_104 : f32 to vector<16x64xf32>
    %400 = arith.maximumf %398, %399 : vector<16x64xf32>
    %cst_105 = arith.constant dense<0.000000e+00> : vector<16x32xf32>
    %401 = tpu.matmul %400, %9, %cst_105 {dimension_numbers = #tpu.dot_dimension_numbers<[1], [0], [0], [1], [0, 0, 1, 1], [], []>} : vector<16x64xf32>, vector<64x32xf32>, vector<16x32xf32> -> vector<16x32xf32>
    %402 = vector.broadcast %14 : vector<1x32xf32> to vector<16x32xf32>
    %403 = arith.addf %401, %402 : vector<16x32xf32>
    %404 = arith.addf %403, %395 : vector<16x32xf32>
    %cst_106 = arith.constant dense<0.000000e+00> : vector<16xf32>
    %405 = vector.multi_reduction <add>, %404, %cst_106 [1] : vector<16x32xf32> to vector<16xf32>
    %406 = vector.shape_cast %405 : vector<16xf32> to vector<16x1xf32>
    %cst_107 = arith.constant 3.200000e+01 : f32
    %407 = vector.broadcast %cst_107 : f32 to vector<16x1xf32>
    %408 = arith.divf %406, %407 : vector<16x1xf32>
    %409 = vector.broadcast %408 : vector<16x1xf32> to vector<16x32xf32>
    %410 = arith.subf %404, %409 : vector<16x32xf32>
    %411 = arith.mulf %410, %410 : vector<16x32xf32>
    %cst_108 = arith.constant dense<0.000000e+00> : vector<16xf32>
    %412 = vector.multi_reduction <add>, %411, %cst_108 [1] : vector<16x32xf32> to vector<16xf32>
    %413 = vector.shape_cast %412 : vector<16xf32> to vector<16x1xf32>
    %cst_109 = arith.constant 3.200000e+01 : f32
    %414 = vector.broadcast %cst_109 : f32 to vector<16x1xf32>
    %415 = arith.divf %413, %414 : vector<16x1xf32>
    %416 = vector.broadcast %408 : vector<16x1xf32> to vector<16x32xf32>
    %417 = arith.subf %404, %416 : vector<16x32xf32>
    %cst_110 = arith.constant 9.99999974E-6 : f32
    %418 = vector.broadcast %cst_110 : f32 to vector<16x1xf32>
    %419 = arith.addf %415, %418 : vector<16x1xf32>
    %420 = math.rsqrt %419 : vector<16x1xf32>
    %421 = vector.broadcast %420 : vector<16x1xf32> to vector<16x32xf32>
    %422 = arith.mulf %417, %421 : vector<16x32xf32>
    %423 = vector.broadcast %19 : vector<1x32xf32> to vector<16x32xf32>
    %424 = arith.mulf %422, %423 : vector<16x32xf32>
    %425 = vector.broadcast %20 : vector<1x32xf32> to vector<16x32xf32>
    %426 = arith.addf %424, %425 : vector<16x32xf32>
    %c0_111 = arith.constant 0 : index
    %c0_112 = arith.constant 0 : index
    %427 = vector.load %arg5[%c0_111, %c0_112] : memref<16x32xf32, #tpu.memory_space<vmem>>, vector<16x32xf32>
    tpu.vector_store %arg5[%c0_111, %c0_112], %426 {strides = array<i32>} : memref<16x32xf32, #tpu.memory_space<vmem>>, vector<16x32xf32>,
    return
  }
}

</mosaic_0001>

<llo_original>
// kernel: decoder_layer.1
$region0: #{decoder_layer.1}
  #allocation0 [shape = 'u32[]', space=smem, size = 0x4, offset = 0x4, fixed_abs, tag = 'smem constant byte address 0x4 - core index']
  #allocation1 [shape = 'u32[72,128]{1,0:T(1,128)}', space=vmem, size = 0x9000, scoped, tag = 'internal scratch']
  %s0 = inlined_call_operand.vmem [shape: f32[32,32], index: 0, kind: input, shape index: {}]
  %s1 = inlined_call_operand.vmem [shape: f32[16,16], index: 1, kind: input, shape index: {}]
  %s2 = inlined_call_operand.vmem [shape: f32[32,192], index: 2, kind: input, shape index: {}]
  %s3 = inlined_call_operand.vmem [shape: f32[64,32], index: 3, kind: input, shape index: {}]
  %s4 = inlined_call_operand.vmem [shape: f32[9,128], index: 4, kind: input, shape index: {}]
  %s5 = inlined_call_operand.hbm [shape: f32[16,32], index: 5, kind: output, shape index: {}]
  %s6 = sld [smem:[#allocation0]]
  $region30: #{decoder_layer.1} parent=0
    _
  %s8 = ssub.s32 1, %s6
  %s9 = scalar_select 0, %s8, %s6
  $region1: #{decoder_layer.1} parent=0
    #allocation2 [shape = 'u8[8192]{0}', space=vmem, size = 0x2000, scoped, tag = 'output window, operand 0, single buffered']
    #allocation3 [shape = 's32[1]{0}', space=sflag, size = 0x4, scoped, tag = 'scoped memory for decoder_layer.1']
    %10 = vsyncpa [#allocation3], 0
    // Predicated region
    $region2: #{decoder_layer.1} parent=1 // pred_check
      _
    $region3: #{decoder_layer.1} parent=1 // pred_check_branch
      %12 = sbr.rel (0) target = $region5
    $region4: #{decoder_layer.1} parent=1 // pred_region
      _
    $region5: #{decoder_layer.1} parent=1 // pred_fallthru
      _
    // Predicated region
    $region6: #{decoder_layer.1} parent=1 // pred_check
      _
    $region7: #{decoder_layer.1} parent=1 // pred_check_branch
      %14 = sbr.rel (0) target = $region9
    $region8: #{decoder_layer.1} parent=1 // pred_region
      _
    $region9: #{decoder_layer.1} parent=1 // pred_fallthru
      _
    // Predicated region
    $region10: #{decoder_layer.1} parent=1 // pred_check
      _
    $region11: #{decoder_layer.1} parent=1 // pred_check_branch
      %16 = sbr.rel (0) target = $region13
    $region12: #{decoder_layer.1} parent=1 // pred_region
      _
    $region13: #{decoder_layer.1} parent=1 // pred_fallthru
      _
    // Predicated region
    $region14: #{decoder_layer.1} parent=1 // pred_check
      _
    $region15: #{decoder_layer.1} parent=1 // pred_check_branch
      %18 = sbr.rel (0) target = $region17
    $region16: #{decoder_layer.1} parent=1 // pred_region
      _
    $region17: #{decoder_layer.1} parent=1 // pred_fallthru
      _
    // Predicated region
    $region18: #{decoder_layer.1} parent=1 // pred_check
      _
    $region19: #{decoder_layer.1} parent=1 // pred_check_branch
      %20 = sbr.rel (0) target = $region21
    $region20: #{decoder_layer.1} parent=1 // pred_region
      _
    $region21: #{decoder_layer.1} parent=1 // pred_fallthru
      _
    %v21 = vld [vmem:[%s0] sm:$0xff]
    %v22 = vld [vmem:[%s0 + $0x8] sm:$0xff]
    %v23 = vld [vmem:[%s0 + $0x10] sm:$0xff]
    %v24 = vld [vmem:[%s0 + $0x18] sm:$0xff]
    %v25 = vld [vmem:[%s1] sm:$0xff]
    %v26 = vld [vmem:[%s1 + $0x8] sm:$0xff]
    %v27 = vld [vmem:[%s2] sm:$0xff]
    %v28 = vld [vmem:[%s2 + $0x8] sm:$0xff]
    %v29 = vld [vmem:[%s2 + $0x10] sm:$0xff]
    %v30 = vld [vmem:[%s2 + $0x18] sm:$0xff]
    %v31 = vld [vmem:[%s2 + $0x20] sm:$0xff]
    %v32 = vld [vmem:[%s2 + $0x28] sm:$0xff]
    %v33 = vld [vmem:[%s2 + $0x30] sm:$0xff]
    %v34 = vld [vmem:[%s2 + $0x38] sm:$0xff]
    %v35 = vld [vmem:[%s3] sm:$0xff]
    %v36 = vld [vmem:[%s3 + $0x8] sm:$0xff]
    %v37 = vld [vmem:[%s3 + $0x10] sm:$0xff]
    %v38 = vld [vmem:[%s3 + $0x18] sm:$0xff]
    %v39 = vld [vmem:[%s3 + $0x20] sm:$0xff]
    %v40 = vld [vmem:[%s3 + $0x28] sm:$0xff]
    %v41 = vld [vmem:[%s3 + $0x30] sm:$0xff]
    %v42 = vld [vmem:[%s3 + $0x38] sm:$0xff]
    %v43 = vld [vmem:[%s4] sm:$0xff]
    %v44 = vld [vmem:[%s4 + $0x8] sm:$0x1]
    %v45 = vperm.slane %v43, 0
    %vm46 = vcmask 261120
    %v48 = vsel %vm46, %v21, 0
    %v51 = vsel %vm46, %v22, 0
    %53 = vmatpush.msra.mxu0 0.0
    %54 = vmatpush.msra.mxu0 0.0
    %55 = vmatpush.msra.mxu0 0.0
    %56 = vmatpush.msra.mxu0 0.0
    %57 = vmatpush.msra.mxu0 0.0
    %58 = vmatpush.msra.mxu0 0.0
    %59 = vmatpush.msra.mxu0 0.0
    %60 = vmatpush.msra.mxu0 0.0
    %61 = vmatpush.msra.mxu0 0.0
    %62 = vmatpush.msra.mxu0 0.0
    %63 = vmatpush.msra.mxu0 0.0
    %64 = vmatpush.msra.mxu0 0.0
    %65 = vmatpush.msra.mxu0 %v33
    %66 = vmatpush.msra.mxu0 %v31
    %67 = vmatpush.msra.mxu0 %v29
    %68 = vmatpush.msra.mxu0 %v27
    %69 = vmatmul.f32.gmra.mxu0 %v48
    %v70 = vpop.f32.mrf.mxu0
    %v71 = vadd.f32 %v45, %v70
    %72 = vmatmul.f32.gmra.mxu0 %v51
    %v73 = vpop.f32.mrf.mxu0
    %v74 = vadd.f32 %v45, %v73
    %75 = vdwg.mxu0
    %77 = vrot.lane.b32.xlu0 %v71, 96
    %v78 = vpop.permute.xlu0 %77
    %vm79 = vcmask 64512
    %v80 = vsel %vm79, %v71, 0
    %v82 = vsel %vm79, %v78, 0
    %84 = vmatpush.xpose.msra.mxu0 0.0
    %85 = vmatpush.xpose.msra.mxu0 0.0
    %86 = vmatpush.xpose.msra.mxu0 0.0
    %87 = vmatpush.xpose.msra.mxu0 0.0
    %88 = vmatpush.xpose.msra.mxu0 0.0
    %89 = vmatpush.xpose.msra.mxu0 0.0
    %90 = vmatpush.xpose.msra.mxu0 0.0
    %91 = vmatpush.xpose.msra.mxu0 0.0
    %92 = vmatpush.xpose.msra.mxu0 0.0
    %93 = vmatpush.xpose.msra.mxu0 0.0
    %94 = vmatpush.xpose.msra.mxu0 0.0
    %95 = vmatpush.xpose.msra.mxu0 0.0
    %96 = vmatpush.xpose.msra.mxu0 0.0
    %97 = vmatpush.xpose.msra.mxu0 0.0
    %98 = vmatpush.xpose.msra.mxu0 0.0
    %99 = vmatpush.xpose.msra.mxu0 %v82
    %100 = vmatmul.f32.gmra.mxu0 %v80
    %v101 = vpop.f32.mrf.mxu0
    %v102 = vadd.f32 0.0, %v101
    %103 = vdwg.mxu0
    %v104 = vmul.f32 %v102, 0.35355338
    %v105 = vadd.f32 %v104, %v25
    %v106 = vsel %vm79, %v105, -inf
    %107 = vmax.xlane.f32.xlu0 %v106
    %v108 = vpop.xlane.xlu0 %107
    %v109 = vsub.f32 %v105, %v108
    %v110 = vmul.f32 %v109, 1.442695
    %v111 = vpow.pop %v110
    %v112 = vsel %vm79, %v111, 0.0
    %113 = vadd.xlane.f32.xlu0 %v112
    %v114 = vpop.xlane.xlu0 %113
    %v115 = vrcp.pop %v114
    %v116 = vmul.f32 %v114, %v115
    %v117 = vsub.f32 1.0, %v116
    %v118 = vmul.f32 %v115, %v117
    %v119 = vadd.f32 %v115, %v118
    %vm120 = vweird.f32 %v114
    %vm121 = vweird.f32 %v115
    %vm122 = vmor %vm120, %vm121
    %v123 = vsel %vm122, %v115, %v119
    %v124 = vand.u32 2147483647, %v114
    %vm125 = vcmp.eq.f32.partialorder %v124, 8.507059e+37
    %v126 = vand.u32 %v114, 2147483648
    %v127 = vor.u32 1.1754944e-38, %v126
    %v128 = vsel %vm125, %v127, %v123
    %v129 = vmul.f32 %v111, %v128
    %130 = vrot.lane.b32.xlu0 %v71, 64
    %v131 = vpop.permute.xlu0 %130
    %v134 = vsel %vm79, %v129, 0
    %136 = vmatpush.msra.mxu0 0.0
    %137 = vmatpush.msra.mxu0 0.0
    %138 = vmatpush.msra.mxu0 0.0
    %139 = vmatpush.msra.mxu0 0.0
    %140 = vmatpush.msra.mxu0 0.0
    %141 = vmatpush.msra.mxu0 0.0
    %142 = vmatpush.msra.mxu0 0.0
    %143 = vmatpush.msra.mxu0 0.0
    %144 = vmatpush.msra.mxu0 0.0
    %145 = vmatpush.msra.mxu0 0.0
    %146 = vmatpush.msra.mxu0 0.0
    %147 = vmatpush.msra.mxu0 0.0
    %148 = vmatpush.msra.mxu0 0.0
    %149 = vmatpush.msra.mxu0 0.0
    %150 = vmatpush.msra.mxu0 0.0
    %151 = vmatpush.msra.mxu0 %v131
    %152 = vmatmul.f32.gmra.mxu0 %v134
    %v153 = vpop.f32.mrf.mxu0
    %v154 = vadd.f32 0.0, %v153
    %155 = vdwg.mxu0
    %156 = vrot.lane.b32.xlu0 %v71, 120
    %v157 = vpop.permute.xlu0 %156
    %158 = vrot.lane.b32.xlu0 %v71, 88
    %v159 = vpop.permute.xlu0 %158
    %v160 = vsel %vm79, %v157, 0
    %v162 = vsel %vm79, %v159, 0
    %164 = vmatpush.xpose.msra.mxu0 0.0
    %165 = vmatpush.xpose.msra.mxu0 0.0
    %166 = vmatpush.xpose.msra.mxu0 0.0
    %167 = vmatpush.xpose.msra.mxu0 0.0
    %168 = vmatpush.xpose.msra.mxu0 0.0
    %169 = vmatpush.xpose.msra.mxu0 0.0
    %170 = vmatpush.xpose.msra.mxu0 0.0
    %171 = vmatpush.xpose.msra.mxu0 0.0
    %172 = vmatpush.xpose.msra.mxu0 0.0
    %173 = vmatpush.xpose.msra.mxu0 0.0
    %174 = vmatpush.xpose.msra.mxu0 0.0
    %175 = vmatpush.xpose.msra.mxu0 0.0
    %176 = vmatpush.xpose.msra.mxu0 0.0
    %177 = vmatpush.xpose.msra.mxu0 0.0
    %178 = vmatpush.xpose.msra.mxu0 0.0
    %179 = vmatpush.xpose.msra.mxu0 %v162
    %180 = vmatmul.f32.gmra.mxu0 %v160
    %v181 = vpop.f32.mrf.mxu0
    %v182 = vadd.f32 0.0, %v181
    %183 = vdwg.mxu0
    %v184 = vmul.f32 %v182, 0.35355338
    %v185 = vadd.f32 %v184, %v25
    %v186 = vsel %vm79, %v185, -inf
    %187 = vmax.xlane.f32.xlu0 %v186
    %v188 = vpop.xlane.xlu0 %187
    %v189 = vsub.f32 %v185, %v188
    %v190 = vmul.f32 %v189, 1.442695
    %v191 = vpow.pop %v190
    %v192 = vsel %vm79, %v191, 0.0
    %193 = vadd.xlane.f32.xlu0 %v192
    %v194 = vpop.xlane.xlu0 %193
    %v195 = vrcp.pop %v194
    %v196 = vmul.f32 %v194, %v195
    %v197 = vsub.f32 1.0, %v196
    %v198 = vmul.f32 %v195, %v197
    %v199 = vadd.f32 %v195, %v198
    %vm200 = vweird.f32 %v194
    %vm201 = vweird.f32 %v195
    %vm202 = vmor %vm200, %vm201
    %v203 = vsel %vm202, %v195, %v199
    %v204 = vand.u32 2147483647, %v194
    %vm205 = vcmp.eq.f32.partialorder %v204, 8.507059e+37
    %v206 = vand.u32 %v194, 2147483648
    %v207 = vor.u32 1.1754944e-38, %v206
    %v208 = vsel %vm205, %v207, %v203
    %v209 = vmul.f32 %v191, %v208
    %210 = vrot.lane.b32.xlu0 %v71, 56
    %v211 = vpop.permute.xlu0 %210
    %v214 = vsel %vm79, %v209, 0
    %216 = vmatpush.msra.mxu0 0.0
    %217 = vmatpush.msra.mxu0 0.0
    %218 = vmatpush.msra.mxu0 0.0
    %219 = vmatpush.msra.mxu0 0.0
    %220 = vmatpush.msra.mxu0 0.0
    %221 = vmatpush.msra.mxu0 0.0
    %222 = vmatpush.msra.mxu0 0.0
    %223 = vmatpush.msra.mxu0 0.0
    %224 = vmatpush.msra.mxu0 0.0
    %225 = vmatpush.msra.mxu0 0.0
    %226 = vmatpush.msra.mxu0 0.0
    %227 = vmatpush.msra.mxu0 0.0
    %228 = vmatpush.msra.mxu0 0.0
    %229 = vmatpush.msra.mxu0 0.0
    %230 = vmatpush.msra.mxu0 0.0
    %231 = vmatpush.msra.mxu0 %v211
    %232 = vmatmul.f32.gmra.mxu0 %v214
    %v233 = vpop.f32.mrf.mxu0
    %v234 = vadd.f32 0.0, %v233
    %235 = vdwg.mxu0
    %236 = vrot.lane.b32.xlu0 %v71, 112
    %v237 = vpop.permute.xlu0 %236
    %238 = vrot.lane.b32.xlu0 %v71, 80
    %v239 = vpop.permute.xlu0 %238
    %v240 = vsel %vm79, %v237, 0
    %v242 = vsel %vm79, %v239, 0
    %244 = vmatpush.xpose.msra.mxu0 0.0
    %245 = vmatpush.xpose.msra.mxu0 0.0
    %246 = vmatpush.xpose.msra.mxu0 0.0
    %247 = vmatpush.xpose.msra.mxu0 0.0
    %248 = vmatpush.xpose.msra.mxu0 0.0
    %249 = vmatpush.xpose.msra.mxu0 0.0
    %250 = vmatpush.xpose.msra.mxu0 0.0
    %251 = vmatpush.xpose.msra.mxu0 0.0
    %252 = vmatpush.xpose.msra.mxu0 0.0
    %253 = vmatpush.xpose.msra.mxu0 0.0
    %254 = vmatpush.xpose.msra.mxu0 0.0
    %255 = vmatpush.xpose.msra.mxu0 0.0
    %256 = vmatpush.xpose.msra.mxu0 0.0
    %257 = vmatpush.xpose.msra.mxu0 0.0
    %258 = vmatpush.xpose.msra.mxu0 0.0
    %259 = vmatpush.xpose.msra.mxu0 %v242
    %260 = vmatmul.f32.gmra.mxu0 %v240
    %v261 = vpop.f32.mrf.mxu0
    %v262 = vadd.f32 0.0, %v261
    %263 = vdwg.mxu0
    %v264 = vmul.f32 %v262, 0.35355338
    %v265 = vadd.f32 %v264, %v25
    %v266 = vsel %vm79, %v265, -inf
    %267 = vmax.xlane.f32.xlu0 %v266
    %v268 = vpop.xlane.xlu0 %267
    %v269 = vsub.f32 %v265, %v268
    %v270 = vmul.f32 %v269, 1.442695
    %v271 = vpow.pop %v270
    %v272 = vsel %vm79, %v271, 0.0
    %273 = vadd.xlane.f32.xlu0 %v272
    %v274 = vpop.xlane.xlu0 %273
    %v275 = vrcp.pop %v274
    %v276 = vmul.f32 %v274, %v275
    %v277 = vsub.f32 1.0, %v276
    %v278 = vmul.f32 %v275, %v277
    %v279 = vadd.f32 %v275, %v278
    %vm280 = vweird.f32 %v274
    %vm281 = vweird.f32 %v275
    %vm282 = vmor %vm280, %vm281
    %v283 = vsel %vm282, %v275, %v279
    %v284 = vand.u32 2147483647, %v274
    %vm285 = vcmp.eq.f32.partialorder %v284, 8.507059e+37
    %v286 = vand.u32 %v274, 2147483648
    %v287 = vor.u32 1.1754944e-38, %v286
    %v288 = vsel %vm285, %v287, %v283
    %v289 = vmul.f32 %v271, %v288
    %290 = vrot.lane.b32.xlu0 %v71, 48
    %v291 = vpop.permute.xlu0 %290
    %v294 = vsel %vm79, %v289, 0
    %296 = vmatpush.msra.mxu0 0.0
    %297 = vmatpush.msra.mxu0 0.0
    %298 = vmatpush.msra.mxu0 0.0
    %299 = vmatpush.msra.mxu0 0.0
    %300 = vmatpush.msra.mxu0 0.0
    %301 = vmatpush.msra.mxu0 0.0
    %302 = vmatpush.msra.mxu0 0.0
    %303 = vmatpush.msra.mxu0 0.0
    %304 = vmatpush.msra.mxu0 0.0
    %305 = vmatpush.msra.mxu0 0.0
    %306 = vmatpush.msra.mxu0 0.0
    %307 = vmatpush.msra.mxu0 0.0
    %308 = vmatpush.msra.mxu0 0.0
    %309 = vmatpush.msra.mxu0 0.0
    %310 = vmatpush.msra.mxu0 0.0
    %311 = vmatpush.msra.mxu0 %v291
    %312 = vmatmul.f32.gmra.mxu0 %v294
    %v313 = vpop.f32.mrf.mxu0
    %v314 = vadd.f32 0.0, %v313
    %315 = vdwg.mxu0
    %316 = vrot.lane.b32.xlu0 %v71, 104
    %v317 = vpop.permute.xlu0 %316
    %318 = vrot.lane.b32.xlu0 %v71, 72
    %v319 = vpop.permute.xlu0 %318
    %v320 = vsel %vm79, %v317, 0
    %v322 = vsel %vm79, %v319, 0
    %324 = vmatpush.xpose.msra.mxu0 0.0
    %325 = vmatpush.xpose.msra.mxu0 0.0
    %326 = vmatpush.xpose.msra.mxu0 0.0
    %327 = vmatpush.xpose.msra.mxu0 0.0
    %328 = vmatpush.xpose.msra.mxu0 0.0
    %329 = vmatpush.xpose.msra.mxu0 0.0
    %330 = vmatpush.xpose.msra.mxu0 0.0
    %331 = vmatpush.xpose.msra.mxu0 0.0
    %332 = vmatpush.xpose.msra.mxu0 0.0
    %333 = vmatpush.xpose.msra.mxu0 0.0
    %334 = vmatpush.xpose.msra.mxu0 0.0
    %335 = vmatpush.xpose.msra.mxu0 0.0
    %336 = vmatpush.xpose.msra.mxu0 0.0
    %337 = vmatpush.xpose.msra.mxu0 0.0
    %338 = vmatpush.xpose.msra.mxu0 0.0
    %339 = vmatpush.xpose.msra.mxu0 %v322
    %340 = vmatmul.f32.gmra.mxu0 %v320
    %v341 = vpop.f32.mrf.mxu0
    %v342 = vadd.f32 0.0, %v341
    %343 = vdwg.mxu0
    %v344 = vmul.f32 %v342, 0.35355338
    %v345 = vadd.f32 %v344, %v25
    %v346 = vsel %vm79, %v345, -inf
    %347 = vmax.xlane.f32.xlu0 %v346
    %v348 = vpop.xlane.xlu0 %347
    %v349 = vsub.f32 %v345, %v348
    %v350 = vmul.f32 %v349, 1.442695
    %v351 = vpow.pop %v350
    %v352 = vsel %vm79, %v351, 0.0
    %353 = vadd.xlane.f32.xlu0 %v352
    %v354 = vpop.xlane.xlu0 %353
    %v355 = vrcp.pop %v354
    %v356 = vmul.f32 %v354, %v355
    %v357 = vsub.f32 1.0, %v356
    %v358 = vmul.f32 %v355, %v357
    %v359 = vadd.f32 %v355, %v358
    %vm360 = vweird.f32 %v354
    %vm361 = vweird.f32 %v355
    %vm362 = vmor %vm360, %vm361
    %v363 = vsel %vm362, %v355, %v359
    %v364 = vand.u32 2147483647, %v354
    %vm365 = vcmp.eq.f32.partialorder %v364, 8.507059e+37
    %v366 = vand.u32 %v354, 2147483648
    %v367 = vor.u32 1.1754944e-38, %v366
    %v368 = vsel %vm365, %v367, %v363
    %v369 = vmul.f32 %v351, %v368
    %370 = vrot.lane.b32.xlu0 %v71, 40
    %v371 = vpop.permute.xlu0 %370
    %v374 = vsel %vm79, %v369, 0
    %376 = vmatpush.msra.mxu0 0.0
    %377 = vmatpush.msra.mxu0 0.0
    %378 = vmatpush.msra.mxu0 0.0
    %379 = vmatpush.msra.mxu0 0.0
    %380 = vmatpush.msra.mxu0 0.0
    %381 = vmatpush.msra.mxu0 0.0
    %382 = vmatpush.msra.mxu0 0.0
    %383 = vmatpush.msra.mxu0 0.0
    %384 = vmatpush.msra.mxu0 0.0
    %385 = vmatpush.msra.mxu0 0.0
    %386 = vmatpush.msra.mxu0 0.0
    %387 = vmatpush.msra.mxu0 0.0
    %388 = vmatpush.msra.mxu0 0.0
    %389 = vmatpush.msra.mxu0 0.0
    %390 = vmatpush.msra.mxu0 0.0
    %391 = vmatpush.msra.mxu0 %v371
    %392 = vmatmul.f32.gmra.mxu0 %v374
    %v393 = vpop.f32.mrf.mxu0
    %v394 = vadd.f32 0.0, %v393
    %395 = vdwg.mxu0
    %397 = vrot.lane.b32.xlu0 %v234, 8
    %v398 = vpop.permute.xlu0 %397
    %401 = vrot.lane.b32.xlu0 %v314, 16
    %v402 = vpop.permute.xlu0 %401
    %405 = vrot.lane.b32.xlu0 %v394, 24
    %v406 = vpop.permute.xlu0 %405
    %v408 = vsel %vm79, %v154, %v398
    %vm409 = vcmask 130048
    %v410 = vsel %vm409, %v408, %v402
    %vm411 = vcmask 195584
    %v412 = vsel %vm411, %v410, %v406
    %414 = vrot.lane.b32.xlu0 %v74, 96
    %v415 = vpop.permute.xlu0 %414
    %v416 = vsel %vm79, %v74, 0
    %v418 = vsel %vm79, %v415, 0
    %420 = vmatpush.xpose.msra.mxu0 0.0
    %421 = vmatpush.xpose.msra.mxu0 0.0
    %422 = vmatpush.xpose.msra.mxu0 0.0
    %423 = vmatpush.xpose.msra.mxu0 0.0
    %424 = vmatpush.xpose.msra.mxu0 0.0
    %425 = vmatpush.xpose.msra.mxu0 0.0
    %426 = vmatpush.xpose.msra.mxu0 0.0
    %427 = vmatpush.xpose.msra.mxu0 0.0
    %428 = vmatpush.xpose.msra.mxu0 0.0
    %429 = vmatpush.xpose.msra.mxu0 0.0
    %430 = vmatpush.xpose.msra.mxu0 0.0
    %431 = vmatpush.xpose.msra.mxu0 0.0
    %432 = vmatpush.xpose.msra.mxu0 0.0
    %433 = vmatpush.xpose.msra.mxu0 0.0
    %434 = vmatpush.xpose.msra.mxu0 0.0
    %435 = vmatpush.xpose.msra.mxu0 %v418
    %436 = vmatmul.f32.gmra.mxu0 %v416
    %v437 = vpop.f32.mrf.mxu0
    %v438 = vadd.f32 0.0, %v437
    %439 = vdwg.mxu0
    %v440 = vmul.f32 %v438, 0.35355338
    %v441 = vadd.f32 %v440, %v26
    %v442 = vsel %vm79, %v441, -inf
    %443 = vmax.xlane.f32.xlu0 %v442
    %v444 = vpop.xlane.xlu0 %443
    %v445 = vsub.f32 %v441, %v444
    %v446 = vmul.f32 %v445, 1.442695
    %v447 = vpow.pop %v446
    %v448 = vsel %vm79, %v447, 0.0
    %449 = vadd.xlane.f32.xlu0 %v448
    %v450 = vpop.xlane.xlu0 %449
    %v451 = vrcp.pop %v450
    %v452 = vmul.f32 %v450, %v451
    %v453 = vsub.f32 1.0, %v452
    %v454 = vmul.f32 %v451, %v453
    %v455 = vadd.f32 %v451, %v454
    %vm456 = vweird.f32 %v450
    %vm457 = vweird.f32 %v451
    %vm458 = vmor %vm456, %vm457
    %v459 = vsel %vm458, %v451, %v455
    %v460 = vand.u32 2147483647, %v450
    %vm461 = vcmp.eq.f32.partialorder %v460, 8.507059e+37
    %v462 = vand.u32 %v450, 2147483648
    %v463 = vor.u32 1.1754944e-38, %v462
    %v464 = vsel %vm461, %v463, %v459
    %v465 = vmul.f32 %v447, %v464
    %466 = vrot.lane.b32.xlu0 %v74, 64
    %v467 = vpop.permute.xlu0 %466
    %v470 = vsel %vm79, %v465, 0
    %472 = vmatpush.msra.mxu0 0.0
    %473 = vmatpush.msra.mxu0 0.0
    %474 = vmatpush.msra.mxu0 0.0
    %475 = vmatpush.msra.mxu0 0.0
    %476 = vmatpush.msra.mxu0 0.0
    %477 = vmatpush.msra.mxu0 0.0
    %478 = vmatpush.msra.mxu0 0.0
    %479 = vmatpush.msra.mxu0 0.0
    %480 = vmatpush.msra.mxu0 0.0
    %481 = vmatpush.msra.mxu0 0.0
    %482 = vmatpush.msra.mxu0 0.0
    %483 = vmatpush.msra.mxu0 0.0
    %484 = vmatpush.msra.mxu0 0.0
    %485 = vmatpush.msra.mxu0 0.0
    %486 = vmatpush.msra.mxu0 0.0
    %487 = vmatpush.msra.mxu0 %v467
    %488 = vmatmul.f32.gmra.mxu0 %v470
    %v489 = vpop.f32.mrf.mxu0
    %v490 = vadd.f32 0.0, %v489
    %491 = vdwg.mxu0
    %492 = vrot.lane.b32.xlu0 %v74, 120
    %v493 = vpop.permute.xlu0 %492
    %494 = vrot.lane.b32.xlu0 %v74, 88
    %v495 = vpop.permute.xlu0 %494
    %v496 = vsel %vm79, %v493, 0
    %v498 = vsel %vm79, %v495, 0
    %500 = vmatpush.xpose.msra.mxu0 0.0
    %501 = vmatpush.xpose.msra.mxu0 0.0
    %502 = vmatpush.xpose.msra.mxu0 0.0
    %503 = vmatpush.xpose.msra.mxu0 0.0
    %504 = vmatpush.xpose.msra.mxu0 0.0
    %505 = vmatpush.xpose.msra.mxu0 0.0
    %506 = vmatpush.xpose.msra.mxu0 0.0
    %507 = vmatpush.xpose.msra.mxu0 0.0
    %508 = vmatpush.xpose.msra.mxu0 0.0
    %509 = vmatpush.xpose.msra.mxu0 0.0
    %510 = vmatpush.xpose.msra.mxu0 0.0
    %511 = vmatpush.xpose.msra.mxu0 0.0
    %512 = vmatpush.xpose.msra.mxu0 0.0
    %513 = vmatpush.xpose.msra.mxu0 0.0
    %514 = vmatpush.xpose.msra.mxu0 0.0
    %515 = vmatpush.xpose.msra.mxu0 %v498
    %516 = vmatmul.f32.gmra.mxu0 %v496
    %v517 = vpop.f32.mrf.mxu0
    %v518 = vadd.f32 0.0, %v517
    %519 = vdwg.mxu0
    %v520 = vmul.f32 %v518, 0.35355338
    %v521 = vadd.f32 %v520, %v26
    %v522 = vsel %vm79, %v521, -inf
    %523 = vmax.xlane.f32.xlu0 %v522
    %v524 = vpop.xlane.xlu0 %523
    %v525 = vsub.f32 %v521, %v524
    %v526 = vmul.f32 %v525, 1.442695
    %v527 = vpow.pop %v526
    %v528 = vsel %vm79, %v527, 0.0
    %529 = vadd.xlane.f32.xlu0 %v528
    %v530 = vpop.xlane.xlu0 %529
    %v531 = vrcp.pop %v530
    %v532 = vmul.f32 %v530, %v531
    %v533 = vsub.f32 1.0, %v532
    %v534 = vmul.f32 %v531, %v533
    %v535 = vadd.f32 %v531, %v534
    %vm536 = vweird.f32 %v530
    %vm537 = vweird.f32 %v531
    %vm538 = vmor %vm536, %vm537
    %v539 = vsel %vm538, %v531, %v535
    %v540 = vand.u32 2147483647, %v530
    %vm541 = vcmp.eq.f32.partialorder %v540, 8.507059e+37
    %v542 = vand.u32 %v530, 2147483648
    %v543 = vor.u32 1.1754944e-38, %v542
    %v544 = vsel %vm541, %v543, %v539
    %v545 = vmul.f32 %v527, %v544
    %546 = vrot.lane.b32.xlu0 %v74, 56
    %v547 = vpop.permute.xlu0 %546
    %v550 = vsel %vm79, %v545, 0
    %552 = vmatpush.msra.mxu0 0.0
    %553 = vmatpush.msra.mxu0 0.0
    %554 = vmatpush.msra.mxu0 0.0
    %555 = vmatpush.msra.mxu0 0.0
    %556 = vmatpush.msra.mxu0 0.0
    %557 = vmatpush.msra.mxu0 0.0
    %558 = vmatpush.msra.mxu0 0.0
    %559 = vmatpush.msra.mxu0 0.0
    %560 = vmatpush.msra.mxu0 0.0
    %561 = vmatpush.msra.mxu0 0.0
    %562 = vmatpush.msra.mxu0 0.0
    %563 = vmatpush.msra.mxu0 0.0
    %564 = vmatpush.msra.mxu0 0.0
    %565 = vmatpush.msra.mxu0 0.0
    %566 = vmatpush.msra.mxu0 0.0
    %567 = vmatpush.msra.mxu0 %v547
    %568 = vmatmul.f32.gmra.mxu0 %v550
    %v569 = vpop.f32.mrf.mxu0
    %v570 = vadd.f32 0.0, %v569
    %571 = vdwg.mxu0
    %572 = vrot.lane.b32.xlu0 %v74, 112
    %v573 = vpop.permute.xlu0 %572
    %574 = vrot.lane.b32.xlu0 %v74, 80
    %v575 = vpop.permute.xlu0 %574
    %v576 = vsel %vm79, %v573, 0
    %v578 = vsel %vm79, %v575, 0
    %580 = vmatpush.xpose.msra.mxu0 0.0
    %581 = vmatpush.xpose.msra.mxu0 0.0
    %582 = vmatpush.xpose.msra.mxu0 0.0
    %583 = vmatpush.xpose.msra.mxu0 0.0
    %584 = vmatpush.xpose.msra.mxu0 0.0
    %585 = vmatpush.xpose.msra.mxu0 0.0
    %586 = vmatpush.xpose.msra.mxu0 0.0
    %587 = vmatpush.xpose.msra.mxu0 0.0
    %588 = vmatpush.xpose.msra.mxu0 0.0
    %589 = vmatpush.xpose.msra.mxu0 0.0
    %590 = vmatpush.xpose.msra.mxu0 0.0
    %591 = vmatpush.xpose.msra.mxu0 0.0
    %592 = vmatpush.xpose.msra.mxu0 0.0
    %593 = vmatpush.xpose.msra.mxu0 0.0
    %594 = vmatpush.xpose.msra.mxu0 0.0
    %595 = vmatpush.xpose.msra.mxu0 %v578
    %596 = vmatmul.f32.gmra.mxu0 %v576
    %v597 = vpop.f32.mrf.mxu0
    %v598 = vadd.f32 0.0, %v597
    %599 = vdwg.mxu0
    %v600 = vmul.f32 %v598, 0.35355338
    %v601 = vadd.f32 %v600, %v26
    %v602 = vsel %vm79, %v601, -inf
    %603 = vmax.xlane.f32.xlu0 %v602
    %v604 = vpop.xlane.xlu0 %603
    %v605 = vsub.f32 %v601, %v604
    %v606 = vmul.f32 %v605, 1.442695
    %v607 = vpow.pop %v606
    %v608 = vsel %vm79, %v607, 0.0
    %609 = vadd.xlane.f32.xlu0 %v608
    %v610 = vpop.xlane.xlu0 %609
    %v611 = vrcp.pop %v610
    %v612 = vmul.f32 %v610, %v611
    %v613 = vsub.f32 1.0, %v612
    %v614 = vmul.f32 %v611, %v613
    %v615 = vadd.f32 %v611, %v614
    %vm616 = vweird.f32 %v610
    %vm617 = vweird.f32 %v611
    %vm618 = vmor %vm616, %vm617
    %v619 = vsel %vm618, %v611, %v615
    %v620 = vand.u32 2147483647, %v610
    %vm621 = vcmp.eq.f32.partialorder %v620, 8.507059e+37
    %v622 = vand.u32 %v610, 2147483648
    %v623 = vor.u32 1.1754944e-38, %v622
    %v624 = vsel %vm621, %v623, %v619
    %v625 = vmul.f32 %v607, %v624
    %626 = vrot.lane.b32.xlu0 %v74, 48
    %v627 = vpop.permute.xlu0 %626
    %v630 = vsel %vm79, %v625, 0
    %632 = vmatpush.msra.mxu0 0.0
    %633 = vmatpush.msra.mxu0 0.0
    %634 = vmatpush.msra.mxu0 0.0
    %635 = vmatpush.msra.mxu0 0.0
    %636 = vmatpush.msra.mxu0 0.0
    %637 = vmatpush.msra.mxu0 0.0
    %638 = vmatpush.msra.mxu0 0.0
    %639 = vmatpush.msra.mxu0 0.0
    %640 = vmatpush.msra.mxu0 0.0
    %641 = vmatpush.msra.mxu0 0.0
    %642 = vmatpush.msra.mxu0 0.0
    %643 = vmatpush.msra.mxu0 0.0
    %644 = vmatpush.msra.mxu0 0.0
    %645 = vmatpush.msra.mxu0 0.0
    %646 = vmatpush.msra.mxu0 0.0
    %647 = vmatpush.msra.mxu0 %v627
    %648 = vmatmul.f32.gmra.mxu0 %v630
    %v649 = vpop.f32.mrf.mxu0
    %v650 = vadd.f32 0.0, %v649
    %651 = vdwg.mxu0
    %652 = vrot.lane.b32.xlu0 %v74, 104
    %v653 = vpop.permute.xlu0 %652
    %654 = vrot.lane.b32.xlu0 %v74, 72
    %v655 = vpop.permute.xlu0 %654
    %v656 = vsel %vm79, %v653, 0
    %v658 = vsel %vm79, %v655, 0
    %660 = vmatpush.xpose.msra.mxu0 0.0
    %661 = vmatpush.xpose.msra.mxu0 0.0
    %662 = vmatpush.xpose.msra.mxu0 0.0
    %663 = vmatpush.xpose.msra.mxu0 0.0
    %664 = vmatpush.xpose.msra.mxu0 0.0
    %665 = vmatpush.xpose.msra.mxu0 0.0
    %666 = vmatpush.xpose.msra.mxu0 0.0
    %667 = vmatpush.xpose.msra.mxu0 0.0
    %668 = vmatpush.xpose.msra.mxu0 0.0
    %669 = vmatpush.xpose.msra.mxu0 0.0
    %670 = vmatpush.xpose.msra.mxu0 0.0
    %671 = vmatpush.xpose.msra.mxu0 0.0
    %672 = vmatpush.xpose.msra.mxu0 0.0
    %673 = vmatpush.xpose.msra.mxu0 0.0
    %674 = vmatpush.xpose.msra.mxu0 0.0
    %675 = vmatpush.xpose.msra.mxu0 %v658
    %676 = vmatmul.f32.gmra.mxu0 %v656
    %v677 = vpop.f32.mrf.mxu0
    %v678 = vadd.f32 0.0, %v677
    %679 = vdwg.mxu0
    %v680 = vmul.f32 %v678, 0.35355338
    %v681 = vadd.f32 %v680, %v26
    %v682 = vsel %vm79, %v681, -inf
    %683 = vmax.xlane.f32.xlu0 %v682
    %v684 = vpop.xlane.xlu0 %683
    %v685 = vsub.f32 %v681, %v684
    %v686 = vmul.f32 %v685, 1.442695
    %v687 = vpow.pop %v686
    %v688 = vsel %vm79, %v687, 0.0
    %689 = vadd.xlane.f32.xlu0 %v688
    %v690 = vpop.xlane.xlu0 %689
    %v691 = vrcp.pop %v690
    %v692 = vmul.f32 %v690, %v691
    %v693 = vsub.f32 1.0, %v692
    %v694 = vmul.f32 %v691, %v693
    %v695 = vadd.f32 %v691, %v694
    %vm696 = vweird.f32 %v690
    %vm697 = vweird.f32 %v691
    %vm698 = vmor %vm696, %vm697
    %v699 = vsel %vm698, %v691, %v695
    %v700 = vand.u32 2147483647, %v690
    %vm701 = vcmp.eq.f32.partialorder %v700, 8.507059e+37
    %v702 = vand.u32 %v690, 2147483648
    %v703 = vor.u32 1.1754944e-38, %v702
    %v704 = vsel %vm701, %v703, %v699
    %v705 = vmul.f32 %v687, %v704
    %706 = vrot.lane.b32.xlu0 %v74, 40
    %v707 = vpop.permute.xlu0 %706
    %v710 = vsel %vm79, %v705, 0
    %712 = vmatpush.msra.mxu0 0.0
    %713 = vmatpush.msra.mxu0 0.0
    %714 = vmatpush.msra.mxu0 0.0
    %715 = vmatpush.msra.mxu0 0.0
    %716 = vmatpush.msra.mxu0 0.0
    %717 = vmatpush.msra.mxu0 0.0
    %718 = vmatpush.msra.mxu0 0.0
    %719 = vmatpush.msra.mxu0 0.0
    %720 = vmatpush.msra.mxu0 0.0
    %721 = vmatpush.msra.mxu0 0.0
    %722 = vmatpush.msra.mxu0 0.0
    %723 = vmatpush.msra.mxu0 0.0
    %724 = vmatpush.msra.mxu0 0.0
    %725 = vmatpush.msra.mxu0 0.0
    %726 = vmatpush.msra.mxu0 0.0
    %727 = vmatpush.msra.mxu0 %v707
    %728 = vmatmul.f32.gmra.mxu0 %v710
    %v729 = vpop.f32.mrf.mxu0
    %v730 = vadd.f32 0.0, %v729
    %731 = vdwg.mxu0
    %733 = vrot.lane.b32.xlu0 %v570, 8
    %v734 = vpop.permute.xlu0 %733
    %737 = vrot.lane.b32.xlu0 %v650, 16
    %v738 = vpop.permute.xlu0 %737
    %741 = vrot.lane.b32.xlu0 %v730, 24
    %v742 = vpop.permute.xlu0 %741
    %v744 = vsel %vm79, %v490, %v734
    %v745 = vsel %vm409, %v744, %v738
    %v746 = vsel %vm411, %v745, %v742
    %751 = vrot.lane.b32.xlu0 %v27, 32
    %v752 = vpop.permute.xlu0 %751
    %753 = vrot.lane.b32.xlu0 %v29, 32
    %v754 = vpop.permute.xlu0 %753
    %755 = vrot.lane.b32.xlu0 %v31, 32
    %v756 = vpop.permute.xlu0 %755
    %757 = vrot.lane.b32.xlu0 %v33, 32
    %v758 = vpop.permute.xlu0 %757
    %764 = vrot.lane.b32.xlu0 %v45, 32
    %v765 = vpop.permute.xlu0 %764
    %v768 = vsel %vm46, %v412, 0
    %v771 = vsel %vm46, %v746, 0
    %773 = vmatpush.msra.mxu0 0.0
    %774 = vmatpush.msra.mxu0 0.0
    %775 = vmatpush.msra.mxu0 0.0
    %776 = vmatpush.msra.mxu0 0.0
    %777 = vmatpush.msra.mxu0 0.0
    %778 = vmatpush.msra.mxu0 0.0
    %779 = vmatpush.msra.mxu0 0.0
    %780 = vmatpush.msra.mxu0 0.0
    %781 = vmatpush.msra.mxu0 0.0
    %782 = vmatpush.msra.mxu0 0.0
    %783 = vmatpush.msra.mxu0 0.0
    %784 = vmatpush.msra.mxu0 0.0
    %785 = vmatpush.msra.mxu0 %v758
    %786 = vmatpush.msra.mxu0 %v756
    %787 = vmatpush.msra.mxu0 %v754
    %788 = vmatpush.msra.mxu0 %v752
    %789 = vmatmul.f32.gmra.mxu0 %v768
    %v790 = vpop.f32.mrf.mxu0
    %v791 = vadd.f32 %v765, %v790
    %792 = vmatmul.f32.gmra.mxu0 %v771
    %v793 = vpop.f32.mrf.mxu0
    %v794 = vadd.f32 %v765, %v793
    %795 = vdwg.mxu0
    %v796 = vadd.f32 %v791, %v21
    %v797 = vadd.f32 %v794, %v22
    %v798 = vsel %vm46, %v796, 0.0
    %799 = vadd.xlane.f32.xlu0 %v798
    %v800 = vpop.xlane.xlu0 %799
    %v801 = vsel %vm46, %v797, 0.0
    %802 = vadd.xlane.f32.xlu0 %v801
    %v803 = vpop.xlane.xlu0 %802
    %v804 = vrcp.pop 32.0
    %v805 = vmul.f32 32.0, %v804
    %v806 = vsub.f32 1.0, %v805
    %v807 = vmul.f32 %v804, %v806
    %v808 = vadd.f32 %v804, %v807
    %vm809 = vweird.f32 %v804
    %v810 = vsel %vm809, %v804, %v808
    %v811 = vmul.f32 %v800, %v810
    %v812 = vmul.f32 %v803, %v810
    %v813 = vsub.f32 %v796, %v811
    %v814 = vsub.f32 %v797, %v812
    %v815 = vmul.f32 %v813, %v813
    %v816 = vmul.f32 %v814, %v814
    %v817 = vsel %vm46, %v815, 0.0
    %818 = vadd.xlane.f32.xlu0 %v817
    %v819 = vpop.xlane.xlu0 %818
    %v820 = vsel %vm46, %v816, 0.0
    %821 = vadd.xlane.f32.xlu0 %v820
    %v822 = vpop.xlane.xlu0 %821
    %v823 = vmul.f32 %v819, %v810
    %v824 = vmul.f32 %v822, %v810
    %v825 = vadd.f32 %v823, 1e-05
    %v826 = vadd.f32 %v824, 1e-05
    %v827 = vrsqrt.pop %v825
    %v828 = vmul.f32 %v827, %v825
    %v829 = vmul.f32 %v828, %v827
    %v830 = vmul.f32 0.5, %v829
    %v831 = vsub.f32 1.5, %v830
    %v832 = vmul.f32 %v827, %v831
    %vm833 = vweird.f32 %v825
    %vm834 = vweird.f32 %v827
    %vm835 = vmor %vm833, %vm834
    %v836 = vsel %vm835, %v827, %v832
    %v837 = vrsqrt.pop %v826
    %v838 = vmul.f32 %v837, %v826
    %v839 = vmul.f32 %v838, %v837
    %v840 = vmul.f32 0.5, %v839
    %v841 = vsub.f32 1.5, %v840
    %v842 = vmul.f32 %v837, %v841
    %vm843 = vweird.f32 %v826
    %vm844 = vweird.f32 %v837
    %vm845 = vmor %vm843, %vm844
    %v846 = vsel %vm845, %v837, %v842
    %v847 = vmul.f32 %v813, %v836
    %v848 = vmul.f32 %v814, %v846
    %v849 = vperm.slane %v43, 3
    %v850 = vmul.f32 %v847, %v849
    %v851 = vmul.f32 %v848, %v849
    %v852 = vperm.slane %v43, 4
    %v853 = vadd.f32 %v850, %v852
    %v854 = vadd.f32 %v851, %v852
    %v856 = vsel %vm46, %v853, 0
    %v859 = vsel %vm46, %v854, 0
    %v862 = vsel %vm46, %v23, 0
    %v865 = vsel %vm46, %v24, 0
    %867 = vmatpush.msra.mxu0 0.0
    %868 = vmatpush.msra.mxu0 0.0
    %869 = vmatpush.msra.mxu0 0.0
    %870 = vmatpush.msra.mxu0 0.0
    %871 = vmatpush.msra.mxu0 0.0
    %872 = vmatpush.msra.mxu0 0.0
    %873 = vmatpush.msra.mxu0 0.0
    %874 = vmatpush.msra.mxu0 0.0
    %875 = vmatpush.msra.mxu0 0.0
    %876 = vmatpush.msra.mxu0 0.0
    %877 = vmatpush.msra.mxu0 0.0
    %878 = vmatpush.msra.mxu0 0.0
    %879 = vmatpush.msra.mxu0 %v33
    %880 = vmatpush.msra.mxu0 %v31
    %881 = vmatpush.msra.mxu0 %v29
    %882 = vmatpush.msra.mxu0 %v27
    %883 = vmatmul.f32.gmra.mxu0 %v856
    %v884 = vpop.f32.mrf.mxu0
    %v885 = vadd.f32 %v45, %v884
    %886 = vmatmul.f32.gmra.mxu0 %v859
    %v887 = vpop.f32.mrf.mxu0
    %v888 = vadd.f32 %v45, %v887
    %889 = vmatmul.f32.gmra.mxu0 %v862
    %v890 = vpop.f32.mrf.mxu0
    %v891 = vadd.f32 %v45, %v890
    %892 = vmatmul.f32.gmra.mxu0 %v865
    %v893 = vpop.f32.mrf.mxu0
    %v894 = vadd.f32 %v45, %v893
    %895 = vdwg.mxu0
    %897 = vrot.lane.b32.xlu0 %v891, 96
    %v898 = vpop.permute.xlu0 %897
    %v900 = vsel %vm79, %v885, 0
    %v902 = vsel %vm79, %v898, 0
    %904 = vmatpush.xpose.msra.mxu0 0.0
    %905 = vmatpush.xpose.msra.mxu0 0.0
    %906 = vmatpush.xpose.msra.mxu0 0.0
    %907 = vmatpush.xpose.msra.mxu0 0.0
    %908 = vmatpush.xpose.msra.mxu0 0.0
    %909 = vmatpush.xpose.msra.mxu0 0.0
    %910 = vmatpush.xpose.msra.mxu0 0.0
    %911 = vmatpush.xpose.msra.mxu0 0.0
    %912 = vmatpush.xpose.msra.mxu0 0.0
    %913 = vmatpush.xpose.msra.mxu0 0.0
    %914 = vmatpush.xpose.msra.mxu0 0.0
    %915 = vmatpush.xpose.msra.mxu0 0.0
    %916 = vmatpush.xpose.msra.mxu0 0.0
    %917 = vmatpush.xpose.msra.mxu0 0.0
    %918 = vmatpush.xpose.msra.mxu0 0.0
    %919 = vmatpush.xpose.msra.mxu0 %v902
    %920 = vmatmul.f32.gmra.mxu0 %v900
    %v921 = vpop.f32.mrf.mxu0
    %v922 = vadd.f32 0.0, %v921
    %923 = vdwg.mxu0
    %v924 = vmul.f32 %v922, 0.35355338
    %926 = vrot.lane.b32.xlu0 %v25, 120
    %v927 = vpop.permute.xlu0 %926
    %v929 = vadd.f32 %v924, %v927
    %v930 = vsel %vm79, %v929, -inf
    %931 = vmax.xlane.f32.xlu0 %v930
    %v932 = vpop.xlane.xlu0 %931
    %v933 = vsub.f32 %v929, %v932
    %v934 = vmul.f32 %v933, 1.442695
    %v935 = vpow.pop %v934
    %v936 = vsel %vm79, %v935, 0.0
    %937 = vadd.xlane.f32.xlu0 %v936
    %v938 = vpop.xlane.xlu0 %937
    %v939 = vrcp.pop %v938
    %v940 = vmul.f32 %v938, %v939
    %v941 = vsub.f32 1.0, %v940
    %v942 = vmul.f32 %v939, %v941
    %v943 = vadd.f32 %v939, %v942
    %vm944 = vweird.f32 %v938
    %vm945 = vweird.f32 %v939
    %vm946 = vmor %vm944, %vm945
    %v947 = vsel %vm946, %v939, %v943
    %v948 = vand.u32 2147483647, %v938
    %vm949 = vcmp.eq.f32.partialorder %v948, 8.507059e+37
    %v950 = vand.u32 %v938, 2147483648
    %v951 = vor.u32 1.1754944e-38, %v950
    %v952 = vsel %vm949, %v951, %v947
    %v953 = vmul.f32 %v935, %v952
    %954 = vrot.lane.b32.xlu0 %v891, 64
    %v955 = vpop.permute.xlu0 %954
    %v958 = vsel %vm79, %v953, 0
    %960 = vmatpush.msra.mxu0 0.0
    %961 = vmatpush.msra.mxu0 0.0
    %962 = vmatpush.msra.mxu0 0.0
    %963 = vmatpush.msra.mxu0 0.0
    %964 = vmatpush.msra.mxu0 0.0
    %965 = vmatpush.msra.mxu0 0.0
    %966 = vmatpush.msra.mxu0 0.0
    %967 = vmatpush.msra.mxu0 0.0
    %968 = vmatpush.msra.mxu0 0.0
    %969 = vmatpush.msra.mxu0 0.0
    %970 = vmatpush.msra.mxu0 0.0
    %971 = vmatpush.msra.mxu0 0.0
    %972 = vmatpush.msra.mxu0 0.0
    %973 = vmatpush.msra.mxu0 0.0
    %974 = vmatpush.msra.mxu0 0.0
    %975 = vmatpush.msra.mxu0 %v955
    %976 = vmatmul.f32.gmra.mxu0 %v958
    %v977 = vpop.f32.mrf.mxu0
    %v978 = vadd.f32 0.0, %v977
    %979 = vdwg.mxu0
    %980 = vrot.lane.b32.xlu0 %v885, 120
    %v981 = vpop.permute.xlu0 %980
    %982 = vrot.lane.b32.xlu0 %v891, 88
    %v983 = vpop.permute.xlu0 %982
    %v984 = vsel %vm79, %v981, 0
    %v986 = vsel %vm79, %v983, 0
    %988 = vmatpush.xpose.msra.mxu0 0.0
    %989 = vmatpush.xpose.msra.mxu0 0.0
    %990 = vmatpush.xpose.msra.mxu0 0.0
    %991 = vmatpush.xpose.msra.mxu0 0.0
    %992 = vmatpush.xpose.msra.mxu0 0.0
    %993 = vmatpush.xpose.msra.mxu0 0.0
    %994 = vmatpush.xpose.msra.mxu0 0.0
    %995 = vmatpush.xpose.msra.mxu0 0.0
    %996 = vmatpush.xpose.msra.mxu0 0.0
    %997 = vmatpush.xpose.msra.mxu0 0.0
    %998 = vmatpush.xpose.msra.mxu0 0.0
    %999 = vmatpush.xpose.msra.mxu0 0.0
    %1000 = vmatpush.xpose.msra.mxu0 0.0
    %1001 = vmatpush.xpose.msra.mxu0 0.0
    %1002 = vmatpush.xpose.msra.mxu0 0.0
    %1003 = vmatpush.xpose.msra.mxu0 %v986
    %1004 = vmatmul.f32.gmra.mxu0 %v984
    %v1005 = vpop.f32.mrf.mxu0
    %v1006 = vadd.f32 0.0, %v1005
    %1007 = vdwg.mxu0
    %v1008 = vmul.f32 %v1006, 0.35355338
    %v1009 = vadd.f32 %v1008, %v927
    %v1010 = vsel %vm79, %v1009, -inf
    %1011 = vmax.xlane.f32.xlu0 %v1010
    %v1012 = vpop.xlane.xlu0 %1011
    %v1013 = vsub.f32 %v1009, %v1012
    %v1014 = vmul.f32 %v1013, 1.442695
    %v1015 = vpow.pop %v1014
    %v1016 = vsel %vm79, %v1015, 0.0
    %1017 = vadd.xlane.f32.xlu0 %v1016
    %v1018 = vpop.xlane.xlu0 %1017
    %v1019 = vrcp.pop %v1018
    %v1020 = vmul.f32 %v1018, %v1019
    %v1021 = vsub.f32 1.0, %v1020
    %v1022 = vmul.f32 %v1019, %v1021
    %v1023 = vadd.f32 %v1019, %v1022
    %vm1024 = vweird.f32 %v1018
    %vm1025 = vweird.f32 %v1019
    %vm1026 = vmor %vm1024, %vm1025
    %v1027 = vsel %vm1026, %v1019, %v1023
    %v1028 = vand.u32 2147483647, %v1018
    %vm1029 = vcmp.eq.f32.partialorder %v1028, 8.507059e+37
    %v1030 = vand.u32 %v1018, 2147483648
    %v1031 = vor.u32 1.1754944e-38, %v1030
    %v1032 = vsel %vm1029, %v1031, %v1027
    %v1033 = vmul.f32 %v1015, %v1032
    %1034 = vrot.lane.b32.xlu0 %v891, 56
    %v1035 = vpop.permute.xlu0 %1034
    %v1038 = vsel %vm79, %v1033, 0
    %1040 = vmatpush.msra.mxu0 0.0
    %1041 = vmatpush.msra.mxu0 0.0
    %1042 = vmatpush.msra.mxu0 0.0
    %1043 = vmatpush.msra.mxu0 0.0
    %1044 = vmatpush.msra.mxu0 0.0
    %1045 = vmatpush.msra.mxu0 0.0
    %1046 = vmatpush.msra.mxu0 0.0
    %1047 = vmatpush.msra.mxu0 0.0
    %1048 = vmatpush.msra.mxu0 0.0
    %1049 = vmatpush.msra.mxu0 0.0
    %1050 = vmatpush.msra.mxu0 0.0
    %1051 = vmatpush.msra.mxu0 0.0
    %1052 = vmatpush.msra.mxu0 0.0
    %1053 = vmatpush.msra.mxu0 0.0
    %1054 = vmatpush.msra.mxu0 0.0
    %1055 = vmatpush.msra.mxu0 %v1035
    %1056 = vmatmul.f32.gmra.mxu0 %v1038
    %v1057 = vpop.f32.mrf.mxu0
    %v1058 = vadd.f32 0.0, %v1057
    %1059 = vdwg.mxu0
    %1060 = vrot.lane.b32.xlu0 %v885, 112
    %v1061 = vpop.permute.xlu0 %1060
    %1062 = vrot.lane.b32.xlu0 %v891, 80
    %v1063 = vpop.permute.xlu0 %1062
    %v1064 = vsel %vm79, %v1061, 0
    %v1066 = vsel %vm79, %v1063, 0
    %1068 = vmatpush.xpose.msra.mxu0 0.0
    %1069 = vmatpush.xpose.msra.mxu0 0.0
    %1070 = vmatpush.xpose.msra.mxu0 0.0
    %1071 = vmatpush.xpose.msra.mxu0 0.0
    %1072 = vmatpush.xpose.msra.mxu0 0.0
    %1073 = vmatpush.xpose.msra.mxu0 0.0
    %1074 = vmatpush.xpose.msra.mxu0 0.0
    %1075 = vmatpush.xpose.msra.mxu0 0.0
    %1076 = vmatpush.xpose.msra.mxu0 0.0
    %1077 = vmatpush.xpose.msra.mxu0 0.0
    %1078 = vmatpush.xpose.msra.mxu0 0.0
    %1079 = vmatpush.xpose.msra.mxu0 0.0
    %1080 = vmatpush.xpose.msra.mxu0 0.0
    %1081 = vmatpush.xpose.msra.mxu0 0.0
    %1082 = vmatpush.xpose.msra.mxu0 0.0
    %1083 = vmatpush.xpose.msra.mxu0 %v1066
    %1084 = vmatmul.f32.gmra.mxu0 %v1064
    %v1085 = vpop.f32.mrf.mxu0
    %v1086 = vadd.f32 0.0, %v1085
    %1087 = vdwg.mxu0
    %v1088 = vmul.f32 %v1086, 0.35355338
    %v1089 = vadd.f32 %v1088, %v927
    %v1090 = vsel %vm79, %v1089, -inf
    %1091 = vmax.xlane.f32.xlu0 %v1090
    %v1092 = vpop.xlane.xlu0 %1091
    %v1093 = vsub.f32 %v1089, %v1092
    %v1094 = vmul.f32 %v1093, 1.442695
    %v1095 = vpow.pop %v1094
    %v1096 = vsel %vm79, %v1095, 0.0
    %1097 = vadd.xlane.f32.xlu0 %v1096
    %v1098 = vpop.xlane.xlu0 %1097
    %v1099 = vrcp.pop %v1098
    %v1100 = vmul.f32 %v1098, %v1099
    %v1101 = vsub.f32 1.0, %v1100
    %v1102 = vmul.f32 %v1099, %v1101
    %v1103 = vadd.f32 %v1099, %v1102
    %vm1104 = vweird.f32 %v1098
    %vm1105 = vweird.f32 %v1099
    %vm1106 = vmor %vm1104, %vm1105
    %v1107 = vsel %vm1106, %v1099, %v1103
    %v1108 = vand.u32 2147483647, %v1098
    %vm1109 = vcmp.eq.f32.partialorder %v1108, 8.507059e+37
    %v1110 = vand.u32 %v1098, 2147483648
    %v1111 = vor.u32 1.1754944e-38, %v1110
    %v1112 = vsel %vm1109, %v1111, %v1107
    %v1113 = vmul.f32 %v1095, %v1112
    %1114 = vrot.lane.b32.xlu0 %v891, 48
    %v1115 = vpop.permute.xlu0 %1114
    %v1118 = vsel %vm79, %v1113, 0
    %1120 = vmatpush.msra.mxu0 0.0
    %1121 = vmatpush.msra.mxu0 0.0
    %1122 = vmatpush.msra.mxu0 0.0
    %1123 = vmatpush.msra.mxu0 0.0
    %1124 = vmatpush.msra.mxu0 0.0
    %1125 = vmatpush.msra.mxu0 0.0
    %1126 = vmatpush.msra.mxu0 0.0
    %1127 = vmatpush.msra.mxu0 0.0
    %1128 = vmatpush.msra.mxu0 0.0
    %1129 = vmatpush.msra.mxu0 0.0
    %1130 = vmatpush.msra.mxu0 0.0
    %1131 = vmatpush.msra.mxu0 0.0
    %1132 = vmatpush.msra.mxu0 0.0
    %1133 = vmatpush.msra.mxu0 0.0
    %1134 = vmatpush.msra.mxu0 0.0
    %1135 = vmatpush.msra.mxu0 %v1115
    %1136 = vmatmul.f32.gmra.mxu0 %v1118
    %v1137 = vpop.f32.mrf.mxu0
    %v1138 = vadd.f32 0.0, %v1137
    %1139 = vdwg.mxu0
    %1140 = vrot.lane.b32.xlu0 %v885, 104
    %v1141 = vpop.permute.xlu0 %1140
    %1142 = vrot.lane.b32.xlu0 %v891, 72
    %v1143 = vpop.permute.xlu0 %1142
    %v1144 = vsel %vm79, %v1141, 0
    %v1146 = vsel %vm79, %v1143, 0
    %1148 = vmatpush.xpose.msra.mxu0 0.0
    %1149 = vmatpush.xpose.msra.mxu0 0.0
    %1150 = vmatpush.xpose.msra.mxu0 0.0
    %1151 = vmatpush.xpose.msra.mxu0 0.0
    %1152 = vmatpush.xpose.msra.mxu0 0.0
    %1153 = vmatpush.xpose.msra.mxu0 0.0
    %1154 = vmatpush.xpose.msra.mxu0 0.0
    %1155 = vmatpush.xpose.msra.mxu0 0.0
    %1156 = vmatpush.xpose.msra.mxu0 0.0
    %1157 = vmatpush.xpose.msra.mxu0 0.0
    %1158 = vmatpush.xpose.msra.mxu0 0.0
    %1159 = vmatpush.xpose.msra.mxu0 0.0
    %1160 = vmatpush.xpose.msra.mxu0 0.0
    %1161 = vmatpush.xpose.msra.mxu0 0.0
    %1162 = vmatpush.xpose.msra.mxu0 0.0
    %1163 = vmatpush.xpose.msra.mxu0 %v1146
    %1164 = vmatmul.f32.gmra.mxu0 %v1144
    %v1165 = vpop.f32.mrf.mxu0
    %v1166 = vadd.f32 0.0, %v1165
    %1167 = vdwg.mxu0
    %v1168 = vmul.f32 %v1166, 0.35355338
    %v1169 = vadd.f32 %v1168, %v927
    %v1170 = vsel %vm79, %v1169, -inf
    %1171 = vmax.xlane.f32.xlu0 %v1170
    %v1172 = vpop.xlane.xlu0 %1171
    %v1173 = vsub.f32 %v1169, %v1172
    %v1174 = vmul.f32 %v1173, 1.442695
    %v1175 = vpow.pop %v1174
    %v1176 = vsel %vm79, %v1175, 0.0
    %1177 = vadd.xlane.f32.xlu0 %v1176
    %v1178 = vpop.xlane.xlu0 %1177
    %v1179 = vrcp.pop %v1178
    %v1180 = vmul.f32 %v1178, %v1179
    %v1181 = vsub.f32 1.0, %v1180
    %v1182 = vmul.f32 %v1179, %v1181
    %v1183 = vadd.f32 %v1179, %v1182
    %vm1184 = vweird.f32 %v1178
    %vm1185 = vweird.f32 %v1179
    %vm1186 = vmor %vm1184, %vm1185
    %v1187 = vsel %vm1186, %v1179, %v1183
    %v1188 = vand.u32 2147483647, %v1178
    %vm1189 = vcmp.eq.f32.partialorder %v1188, 8.507059e+37
    %v1190 = vand.u32 %v1178, 2147483648
    %v1191 = vor.u32 1.1754944e-38, %v1190
    %v1192 = vsel %vm1189, %v1191, %v1187
    %v1193 = vmul.f32 %v1175, %v1192
    %1194 = vrot.lane.b32.xlu0 %v891, 40
    %v1195 = vpop.permute.xlu0 %1194
    %v1198 = vsel %vm79, %v1193, 0
    %1200 = vmatpush.msra.mxu0 0.0
    %1201 = vmatpush.msra.mxu0 0.0
    %1202 = vmatpush.msra.mxu0 0.0
    %1203 = vmatpush.msra.mxu0 0.0
    %1204 = vmatpush.msra.mxu0 0.0
    %1205 = vmatpush.msra.mxu0 0.0
    %1206 = vmatpush.msra.mxu0 0.0
    %1207 = vmatpush.msra.mxu0 0.0
    %1208 = vmatpush.msra.mxu0 0.0
    %1209 = vmatpush.msra.mxu0 0.0
    %1210 = vmatpush.msra.mxu0 0.0
    %1211 = vmatpush.msra.mxu0 0.0
    %1212 = vmatpush.msra.mxu0 0.0
    %1213 = vmatpush.msra.mxu0 0.0
    %1214 = vmatpush.msra.mxu0 0.0
    %1215 = vmatpush.msra.mxu0 %v1195
    %1216 = vmatmul.f32.gmra.mxu0 %v1198
    %v1217 = vpop.f32.mrf.mxu0
    %v1218 = vadd.f32 0.0, %v1217
    %1219 = vdwg.mxu0
    %1221 = vrot.lane.b32.xlu0 %v1058, 8
    %v1222 = vpop.permute.xlu0 %1221
    %1225 = vrot.lane.b32.xlu0 %v1138, 16
    %v1226 = vpop.permute.xlu0 %1225
    %1229 = vrot.lane.b32.xlu0 %v1218, 24
    %v1230 = vpop.permute.xlu0 %1229
    %v1232 = vsel %vm79, %v978, %v1222
    %v1233 = vsel %vm409, %v1232, %v1226
    %v1234 = vsel %vm411, %v1233, %v1230
    %1236 = vrot.lane.b32.xlu0 %v894, 96
    %v1237 = vpop.permute.xlu0 %1236
    %v1239 = vsel %vm79, %v888, 0
    %v1241 = vsel %vm79, %v1237, 0
    %1243 = vmatpush.xpose.msra.mxu0 0.0
    %1244 = vmatpush.xpose.msra.mxu0 0.0
    %1245 = vmatpush.xpose.msra.mxu0 0.0
    %1246 = vmatpush.xpose.msra.mxu0 0.0
    %1247 = vmatpush.xpose.msra.mxu0 0.0
    %1248 = vmatpush.xpose.msra.mxu0 0.0
    %1249 = vmatpush.xpose.msra.mxu0 0.0
    %1250 = vmatpush.xpose.msra.mxu0 0.0
    %1251 = vmatpush.xpose.msra.mxu0 0.0
    %1252 = vmatpush.xpose.msra.mxu0 0.0
    %1253 = vmatpush.xpose.msra.mxu0 0.0
    %1254 = vmatpush.xpose.msra.mxu0 0.0
    %1255 = vmatpush.xpose.msra.mxu0 0.0
    %1256 = vmatpush.xpose.msra.mxu0 0.0
    %1257 = vmatpush.xpose.msra.mxu0 0.0
    %1258 = vmatpush.xpose.msra.mxu0 %v1241
    %1259 = vmatmul.f32.gmra.mxu0 %v1239
    %v1260 = vpop.f32.mrf.mxu0
    %v1261 = vadd.f32 0.0, %v1260
    %1262 = vdwg.mxu0
    %v1263 = vmul.f32 %v1261, 0.35355338
    %1265 = vrot.lane.b32.xlu0 %v26, 120
    %v1266 = vpop.permute.xlu0 %1265
    %v1268 = vadd.f32 %v1263, %v1266
    %v1269 = vsel %vm79, %v1268, -inf
    %1270 = vmax.xlane.f32.xlu0 %v1269
    %v1271 = vpop.xlane.xlu0 %1270
    %v1272 = vsub.f32 %v1268, %v1271
    %v1273 = vmul.f32 %v1272, 1.442695
    %v1274 = vpow.pop %v1273
    %v1275 = vsel %vm79, %v1274, 0.0
    %1276 = vadd.xlane.f32.xlu0 %v1275
    %v1277 = vpop.xlane.xlu0 %1276
    %v1278 = vrcp.pop %v1277
    %v1279 = vmul.f32 %v1277, %v1278
    %v1280 = vsub.f32 1.0, %v1279
    %v1281 = vmul.f32 %v1278, %v1280
    %v1282 = vadd.f32 %v1278, %v1281
    %vm1283 = vweird.f32 %v1277
    %vm1284 = vweird.f32 %v1278
    %vm1285 = vmor %vm1283, %vm1284
    %v1286 = vsel %vm1285, %v1278, %v1282
    %v1287 = vand.u32 2147483647, %v1277
    %vm1288 = vcmp.eq.f32.partialorder %v1287, 8.507059e+37
    %v1289 = vand.u32 %v1277, 2147483648
    %v1290 = vor.u32 1.1754944e-38, %v1289
    %v1291 = vsel %vm1288, %v1290, %v1286
    %v1292 = vmul.f32 %v1274, %v1291
    %1293 = vrot.lane.b32.xlu0 %v894, 64
    %v1294 = vpop.permute.xlu0 %1293
    %v1297 = vsel %vm79, %v1292, 0
    %1299 = vmatpush.msra.mxu0 0.0
    %1300 = vmatpush.msra.mxu0 0.0
    %1301 = vmatpush.msra.mxu0 0.0
    %1302 = vmatpush.msra.mxu0 0.0
    %1303 = vmatpush.msra.mxu0 0.0
    %1304 = vmatpush.msra.mxu0 0.0
    %1305 = vmatpush.msra.mxu0 0.0
    %1306 = vmatpush.msra.mxu0 0.0
    %1307 = vmatpush.msra.mxu0 0.0
    %1308 = vmatpush.msra.mxu0 0.0
    %1309 = vmatpush.msra.mxu0 0.0
    %1310 = vmatpush.msra.mxu0 0.0
    %1311 = vmatpush.msra.mxu0 0.0
    %1312 = vmatpush.msra.mxu0 0.0
    %1313 = vmatpush.msra.mxu0 0.0
    %1314 = vmatpush.msra.mxu0 %v1294
    %1315 = vmatmul.f32.gmra.mxu0 %v1297
    %v1316 = vpop.f32.mrf.mxu0
    %v1317 = vadd.f32 0.0, %v1316
    %1318 = vdwg.mxu0
    %1319 = vrot.lane.b32.xlu0 %v888, 120
    %v1320 = vpop.permute.xlu0 %1319
    %1321 = vrot.lane.b32.xlu0 %v894, 88
    %v1322 = vpop.permute.xlu0 %1321
    %v1323 = vsel %vm79, %v1320, 0
    %v1325 = vsel %vm79, %v1322, 0
    %1327 = vmatpush.xpose.msra.mxu0 0.0
    %1328 = vmatpush.xpose.msra.mxu0 0.0
    %1329 = vmatpush.xpose.msra.mxu0 0.0
    %1330 = vmatpush.xpose.msra.mxu0 0.0
    %1331 = vmatpush.xpose.msra.mxu0 0.0
    %1332 = vmatpush.xpose.msra.mxu0 0.0
    %1333 = vmatpush.xpose.msra.mxu0 0.0
    %1334 = vmatpush.xpose.msra.mxu0 0.0
    %1335 = vmatpush.xpose.msra.mxu0 0.0
    %1336 = vmatpush.xpose.msra.mxu0 0.0
    %1337 = vmatpush.xpose.msra.mxu0 0.0
    %1338 = vmatpush.xpose.msra.mxu0 0.0
    %1339 = vmatpush.xpose.msra.mxu0 0.0
    %1340 = vmatpush.xpose.msra.mxu0 0.0
    %1341 = vmatpush.xpose.msra.mxu0 0.0
    %1342 = vmatpush.xpose.msra.mxu0 %v1325
    %1343 = vmatmul.f32.gmra.mxu0 %v1323
    %v1344 = vpop.f32.mrf.mxu0
    %v1345 = vadd.f32 0.0, %v1344
    %1346 = vdwg.mxu0
    %v1347 = vmul.f32 %v1345, 0.35355338
    %v1348 = vadd.f32 %v1347, %v1266
    %v1349 = vsel %vm79, %v1348, -inf
    %1350 = vmax.xlane.f32.xlu0 %v1349
    %v1351 = vpop.xlane.xlu0 %1350
    %v1352 = vsub.f32 %v1348, %v1351
    %v1353 = vmul.f32 %v1352, 1.442695
    %v1354 = vpow.pop %v1353
    %v1355 = vsel %vm79, %v1354, 0.0
    %1356 = vadd.xlane.f32.xlu0 %v1355
    %v1357 = vpop.xlane.xlu0 %1356
    %v1358 = vrcp.pop %v1357
    %v1359 = vmul.f32 %v1357, %v1358
    %v1360 = vsub.f32 1.0, %v1359
    %v1361 = vmul.f32 %v1358, %v1360
    %v1362 = vadd.f32 %v1358, %v1361
    %vm1363 = vweird.f32 %v1357
    %vm1364 = vweird.f32 %v1358
    %vm1365 = vmor %vm1363, %vm1364
    %v1366 = vsel %vm1365, %v1358, %v1362
    %v1367 = vand.u32 2147483647, %v1357
    %vm1368 = vcmp.eq.f32.partialorder %v1367, 8.507059e+37
    %v1369 = vand.u32 %v1357, 2147483648
    %v1370 = vor.u32 1.1754944e-38, %v1369
    %v1371 = vsel %vm1368, %v1370, %v1366
    %v1372 = vmul.f32 %v1354, %v1371
    %1373 = vrot.lane.b32.xlu0 %v894, 56
    %v1374 = vpop.permute.xlu0 %1373
    %v1377 = vsel %vm79, %v1372, 0
    %1379 = vmatpush.msra.mxu0 0.0
    %1380 = vmatpush.msra.mxu0 0.0
    %1381 = vmatpush.msra.mxu0 0.0
    %1382 = vmatpush.msra.mxu0 0.0
    %1383 = vmatpush.msra.mxu0 0.0
    %1384 = vmatpush.msra.mxu0 0.0
    %1385 = vmatpush.msra.mxu0 0.0
    %1386 = vmatpush.msra.mxu0 0.0
    %1387 = vmatpush.msra.mxu0 0.0
    %1388 = vmatpush.msra.mxu0 0.0
    %1389 = vmatpush.msra.mxu0 0.0
    %1390 = vmatpush.msra.mxu0 0.0
    %1391 = vmatpush.msra.mxu0 0.0
    %1392 = vmatpush.msra.mxu0 0.0
    %1393 = vmatpush.msra.mxu0 0.0
    %1394 = vmatpush.msra.mxu0 %v1374
    %1395 = vmatmul.f32.gmra.mxu0 %v1377
    %v1396 = vpop.f32.mrf.mxu0
    %v1397 = vadd.f32 0.0, %v1396
    %1398 = vdwg.mxu0
    %1399 = vrot.lane.b32.xlu0 %v888, 112
    %v1400 = vpop.permute.xlu0 %1399
    %1401 = vrot.lane.b32.xlu0 %v894, 80
    %v1402 = vpop.permute.xlu0 %1401
    %v1403 = vsel %vm79, %v1400, 0
    %v1405 = vsel %vm79, %v1402, 0
    %1407 = vmatpush.xpose.msra.mxu0 0.0
    %1408 = vmatpush.xpose.msra.mxu0 0.0
    %1409 = vmatpush.xpose.msra.mxu0 0.0
    %1410 = vmatpush.xpose.msra.mxu0 0.0
    %1411 = vmatpush.xpose.msra.mxu0 0.0
    %1412 = vmatpush.xpose.msra.mxu0 0.0
    %1413 = vmatpush.xpose.msra.mxu0 0.0
    %1414 = vmatpush.xpose.msra.mxu0 0.0
    %1415 = vmatpush.xpose.msra.mxu0 0.0
    %1416 = vmatpush.xpose.msra.mxu0 0.0
    %1417 = vmatpush.xpose.msra.mxu0 0.0
    %1418 = vmatpush.xpose.msra.mxu0 0.0
    %1419 = vmatpush.xpose.msra.mxu0 0.0
    %1420 = vmatpush.xpose.msra.mxu0 0.0
    %1421 = vmatpush.xpose.msra.mxu0 0.0
    %1422 = vmatpush.xpose.msra.mxu0 %v1405
    %1423 = vmatmul.f32.gmra.mxu0 %v1403
    %v1424 = vpop.f32.mrf.mxu0
    %v1425 = vadd.f32 0.0, %v1424
    %1426 = vdwg.mxu0
    %v1427 = vmul.f32 %v1425, 0.35355338
    %v1428 = vadd.f32 %v1427, %v1266
    %v1429 = vsel %vm79, %v1428, -inf
    %1430 = vmax.xlane.f32.xlu0 %v1429
    %v1431 = vpop.xlane.xlu0 %1430
    %v1432 = vsub.f32 %v1428, %v1431
    %v1433 = vmul.f32 %v1432, 1.442695
    %v1434 = vpow.pop %v1433
    %v1435 = vsel %vm79, %v1434, 0.0
    %1436 = vadd.xlane.f32.xlu0 %v1435
    %v1437 = vpop.xlane.xlu0 %1436
    %v1438 = vrcp.pop %v1437
    %v1439 = vmul.f32 %v1437, %v1438
    %v1440 = vsub.f32 1.0, %v1439
    %v1441 = vmul.f32 %v1438, %v1440
    %v1442 = vadd.f32 %v1438, %v1441
    %vm1443 = vweird.f32 %v1437
    %vm1444 = vweird.f32 %v1438
    %vm1445 = vmor %vm1443, %vm1444
    %v1446 = vsel %vm1445, %v1438, %v1442
    %v1447 = vand.u32 2147483647, %v1437
    %vm1448 = vcmp.eq.f32.partialorder %v1447, 8.507059e+37
    %v1449 = vand.u32 %v1437, 2147483648
    %v1450 = vor.u32 1.1754944e-38, %v1449
    %v1451 = vsel %vm1448, %v1450, %v1446
    %v1452 = vmul.f32 %v1434, %v1451
    %1453 = vrot.lane.b32.xlu0 %v894, 48
    %v1454 = vpop.permute.xlu0 %1453
    %v1457 = vsel %vm79, %v1452, 0
    %1459 = vmatpush.msra.mxu0 0.0
    %1460 = vmatpush.msra.mxu0 0.0
    %1461 = vmatpush.msra.mxu0 0.0
    %1462 = vmatpush.msra.mxu0 0.0
    %1463 = vmatpush.msra.mxu0 0.0
    %1464 = vmatpush.msra.mxu0 0.0
    %1465 = vmatpush.msra.mxu0 0.0
    %1466 = vmatpush.msra.mxu0 0.0
    %1467 = vmatpush.msra.mxu0 0.0
    %1468 = vmatpush.msra.mxu0 0.0
    %1469 = vmatpush.msra.mxu0 0.0
    %1470 = vmatpush.msra.mxu0 0.0
    %1471 = vmatpush.msra.mxu0 0.0
    %1472 = vmatpush.msra.mxu0 0.0
    %1473 = vmatpush.msra.mxu0 0.0
    %1474 = vmatpush.msra.mxu0 %v1454
    %1475 = vmatmul.f32.gmra.mxu0 %v1457
    %v1476 = vpop.f32.mrf.mxu0
    %v1477 = vadd.f32 0.0, %v1476
    %1478 = vdwg.mxu0
    %1479 = vrot.lane.b32.xlu0 %v888, 104
    %v1480 = vpop.permute.xlu0 %1479
    %1481 = vrot.lane.b32.xlu0 %v894, 72
    %v1482 = vpop.permute.xlu0 %1481
    %v1483 = vsel %vm79, %v1480, 0
    %v1485 = vsel %vm79, %v1482, 0
    %1487 = vmatpush.xpose.msra.mxu0 0.0
    %1488 = vmatpush.xpose.msra.mxu0 0.0
    %1489 = vmatpush.xpose.msra.mxu0 0.0
    %1490 = vmatpush.xpose.msra.mxu0 0.0
    %1491 = vmatpush.xpose.msra.mxu0 0.0
    %1492 = vmatpush.xpose.msra.mxu0 0.0
    %1493 = vmatpush.xpose.msra.mxu0 0.0
    %1494 = vmatpush.xpose.msra.mxu0 0.0
    %1495 = vmatpush.xpose.msra.mxu0 0.0
    %1496 = vmatpush.xpose.msra.mxu0 0.0
    %1497 = vmatpush.xpose.msra.mxu0 0.0
    %1498 = vmatpush.xpose.msra.mxu0 0.0
    %1499 = vmatpush.xpose.msra.mxu0 0.0
    %1500 = vmatpush.xpose.msra.mxu0 0.0
    %1501 = vmatpush.xpose.msra.mxu0 0.0
    %1502 = vmatpush.xpose.msra.mxu0 %v1485
    %1503 = vmatmul.f32.gmra.mxu0 %v1483
    %v1504 = vpop.f32.mrf.mxu0
    %v1505 = vadd.f32 0.0, %v1504
    %1506 = vdwg.mxu0
    %v1507 = vmul.f32 %v1505, 0.35355338
    %v1508 = vadd.f32 %v1507, %v1266
    %v1509 = vsel %vm79, %v1508, -inf
    %1510 = vmax.xlane.f32.xlu0 %v1509
    %v1511 = vpop.xlane.xlu0 %1510
    %v1512 = vsub.f32 %v1508, %v1511
    %v1513 = vmul.f32 %v1512, 1.442695
    %v1514 = vpow.pop %v1513
    %v1515 = vsel %vm79, %v1514, 0.0
    %1516 = vadd.xlane.f32.xlu0 %v1515
    %v1517 = vpop.xlane.xlu0 %1516
    %v1518 = vrcp.pop %v1517
    %v1519 = vmul.f32 %v1517, %v1518
    %v1520 = vsub.f32 1.0, %v1519
    %v1521 = vmul.f32 %v1518, %v1520
    %v1522 = vadd.f32 %v1518, %v1521
    %vm1523 = vweird.f32 %v1517
    %vm1524 = vweird.f32 %v1518
    %vm1525 = vmor %vm1523, %vm1524
    %v1526 = vsel %vm1525, %v1518, %v1522
    %v1527 = vand.u32 2147483647, %v1517
    %vm1528 = vcmp.eq.f32.partialorder %v1527, 8.507059e+37
    %v1529 = vand.u32 %v1517, 2147483648
    %v1530 = vor.u32 1.1754944e-38, %v1529
    %v1531 = vsel %vm1528, %v1530, %v1526
    %v1532 = vmul.f32 %v1514, %v1531
    %1533 = vrot.lane.b32.xlu0 %v894, 40
    %v1534 = vpop.permute.xlu0 %1533
    %v1537 = vsel %vm79, %v1532, 0
    %1539 = vmatpush.msra.mxu0 0.0
    %1540 = vmatpush.msra.mxu0 0.0
    %1541 = vmatpush.msra.mxu0 0.0
    %1542 = vmatpush.msra.mxu0 0.0
    %1543 = vmatpush.msra.mxu0 0.0
    %1544 = vmatpush.msra.mxu0 0.0
    %1545 = vmatpush.msra.mxu0 0.0
    %1546 = vmatpush.msra.mxu0 0.0
    %1547 = vmatpush.msra.mxu0 0.0
    %1548 = vmatpush.msra.mxu0 0.0
    %1549 = vmatpush.msra.mxu0 0.0
    %1550 = vmatpush.msra.mxu0 0.0
    %1551 = vmatpush.msra.mxu0 0.0
    %1552 = vmatpush.msra.mxu0 0.0
    %1553 = vmatpush.msra.mxu0 0.0
    %1554 = vmatpush.msra.mxu0 %v1534
    %1555 = vmatmul.f32.gmra.mxu0 %v1537
    %v1556 = vpop.f32.mrf.mxu0
    %v1557 = vadd.f32 0.0, %v1556
    %1558 = vdwg.mxu0
    %1560 = vrot.lane.b32.xlu0 %v1397, 8
    %v1561 = vpop.permute.xlu0 %1560
    %1564 = vrot.lane.b32.xlu0 %v1477, 16
    %v1565 = vpop.permute.xlu0 %1564
    %1568 = vrot.lane.b32.xlu0 %v1557, 24
    %v1569 = vpop.permute.xlu0 %1568
    %v1571 = vsel %vm79, %v1317, %v1561
    %v1572 = vsel %vm409, %v1571, %v1565
    %v1573 = vsel %vm411, %v1572, %v1569
    %v1575 = vsel %vm46, %v1234, 0
    %v1578 = vsel %vm46, %v1573, 0
    %1580 = vmatpush.msra.mxu0 0.0
    %1581 = vmatpush.msra.mxu0 0.0
    %1582 = vmatpush.msra.mxu0 0.0
    %1583 = vmatpush.msra.mxu0 0.0
    %1584 = vmatpush.msra.mxu0 0.0
    %1585 = vmatpush.msra.mxu0 0.0
    %1586 = vmatpush.msra.mxu0 0.0
    %1587 = vmatpush.msra.mxu0 0.0
    %1588 = vmatpush.msra.mxu0 0.0
    %1589 = vmatpush.msra.mxu0 0.0
    %1590 = vmatpush.msra.mxu0 0.0
    %1591 = vmatpush.msra.mxu0 0.0
    %1592 = vmatpush.msra.mxu0 %v758
    %1593 = vmatpush.msra.mxu0 %v756
    %1594 = vmatpush.msra.mxu0 %v754
    %1595 = vmatpush.msra.mxu0 %v752
    %1596 = vmatmul.f32.gmra.mxu0 %v1575
    %v1597 = vpop.f32.mrf.mxu0
    %v1598 = vadd.f32 %v765, %v1597
    %1599 = vmatmul.f32.gmra.mxu0 %v1578
    %v1600 = vpop.f32.mrf.mxu0
    %v1601 = vadd.f32 %v765, %v1600
    %1602 = vdwg.mxu0
    %v1603 = vadd.f32 %v1598, %v853
    %v1604 = vadd.f32 %v1601, %v854
    %v1605 = vsel %vm46, %v1603, 0.0
    %1606 = vadd.xlane.f32.xlu0 %v1605
    %v1607 = vpop.xlane.xlu0 %1606
    %v1608 = vsel %vm46, %v1604, 0.0
    %1609 = vadd.xlane.f32.xlu0 %v1608
    %v1610 = vpop.xlane.xlu0 %1609
    %v1611 = vmul.f32 %v1607, %v810
    %v1612 = vmul.f32 %v1610, %v810
    %v1613 = vsub.f32 %v1603, %v1611
    %v1614 = vsub.f32 %v1604, %v1612
    %v1615 = vmul.f32 %v1613, %v1613
    %v1616 = vmul.f32 %v1614, %v1614
    %v1617 = vsel %vm46, %v1615, 0.0
    %1618 = vadd.xlane.f32.xlu0 %v1617
    %v1619 = vpop.xlane.xlu0 %1618
    %v1620 = vsel %vm46, %v1616, 0.0
    %1621 = vadd.xlane.f32.xlu0 %v1620
    %v1622 = vpop.xlane.xlu0 %1621
    %v1623 = vmul.f32 %v1619, %v810
    %v1624 = vmul.f32 %v1622, %v810
    %v1625 = vadd.f32 %v1623, 1e-05
    %v1626 = vadd.f32 %v1624, 1e-05
    %v1627 = vrsqrt.pop %v1625
    %v1628 = vmul.f32 %v1627, %v1625
    %v1629 = vmul.f32 %v1628, %v1627
    %v1630 = vmul.f32 0.5, %v1629
    %v1631 = vsub.f32 1.5, %v1630
    %v1632 = vmul.f32 %v1627, %v1631
    %vm1633 = vweird.f32 %v1625
    %vm1634 = vweird.f32 %v1627
    %vm1635 = vmor %vm1633, %vm1634
    %v1636 = vsel %vm1635, %v1627, %v1632
    %v1637 = vrsqrt.pop %v1626
    %v1638 = vmul.f32 %v1637, %v1626
    %v1639 = vmul.f32 %v1638, %v1637
    %v1640 = vmul.f32 0.5, %v1639
    %v1641 = vsub.f32 1.5, %v1640
    %v1642 = vmul.f32 %v1637, %v1641
    %vm1643 = vweird.f32 %v1626
    %vm1644 = vweird.f32 %v1637
    %vm1645 = vmor %vm1643, %vm1644
    %v1646 = vsel %vm1645, %v1637, %v1642
    %v1647 = vmul.f32 %v1613, %v1636
    %v1648 = vmul.f32 %v1614, %v1646
    %v1649 = vperm.slane %v43, 5
    %v1650 = vmul.f32 %v1647, %v1649
    %v1651 = vmul.f32 %v1648, %v1649
    %v1652 = vperm.slane %v43, 6
    %v1653 = vadd.f32 %v1650, %v1652
    %v1654 = vadd.f32 %v1651, %v1652
    %v1655 = vperm.slane %v43, 1
    %v1657 = vsel %vm46, %v1653, 0
    %v1660 = vsel %vm46, %v1654, 0
    %1662 = vmatpush.msra.mxu0 0.0
    %1663 = vmatpush.msra.mxu0 0.0
    %1664 = vmatpush.msra.mxu0 0.0
    %1665 = vmatpush.msra.mxu0 0.0
    %1666 = vmatpush.msra.mxu0 0.0
    %1667 = vmatpush.msra.mxu0 0.0
    %1668 = vmatpush.msra.mxu0 0.0
    %1669 = vmatpush.msra.mxu0 0.0
    %1670 = vmatpush.msra.mxu0 0.0
    %1671 = vmatpush.msra.mxu0 0.0
    %1672 = vmatpush.msra.mxu0 0.0
    %1673 = vmatpush.msra.mxu0 0.0
    %1674 = vmatpush.msra.mxu0 %v34
    %1675 = vmatpush.msra.mxu0 %v32
    %1676 = vmatpush.msra.mxu0 %v30
    %1677 = vmatpush.msra.mxu0 %v28
    %1678 = vmatmul.f32.gmra.mxu0 %v1657
    %v1679 = vpop.f32.mrf.mxu0
    %v1680 = vadd.f32 %v1655, %v1679
    %1681 = vmatmul.f32.gmra.mxu0 %v1660
    %v1682 = vpop.f32.mrf.mxu0
    %v1683 = vadd.f32 %v1655, %v1682
    %1684 = vdwg.mxu0
    %v1685 = vmax.f32 %v1680, 0.0
    %v1686 = vmax.f32 %v1683, 0.0
    %v1687 = vperm.slane %v43, 2
    %vm1688 = vcmask 523264
    %v1690 = vsel %vm1688, %v1685, 0
    %v1693 = vsel %vm1688, %v1686, 0
    %1695 = vmatpush.msra.mxu0 0.0
    %1696 = vmatpush.msra.mxu0 0.0
    %1697 = vmatpush.msra.mxu0 0.0
    %1698 = vmatpush.msra.mxu0 0.0
    %1699 = vmatpush.msra.mxu0 0.0
    %1700 = vmatpush.msra.mxu0 0.0
    %1701 = vmatpush.msra.mxu0 0.0
    %1702 = vmatpush.msra.mxu0 0.0
    %1703 = vmatpush.msra.mxu0 %v42
    %1704 = vmatpush.msra.mxu0 %v41
    %1705 = vmatpush.msra.mxu0 %v40
    %1706 = vmatpush.msra.mxu0 %v39
    %1707 = vmatpush.msra.mxu0 %v38
    %1708 = vmatpush.msra.mxu0 %v37
    %1709 = vmatpush.msra.mxu0 %v36
    %1710 = vmatpush.msra.mxu0 %v35
    %1711 = vmatmul.f32.gmra.mxu0 %v1690
    %v1712 = vpop.f32.mrf.mxu0
    %v1713 = vadd.f32 %v1687, %v1712
    %1714 = vmatmul.f32.gmra.mxu0 %v1693
    %v1715 = vpop.f32.mrf.mxu0
    %v1716 = vadd.f32 %v1687, %v1715
    %1717 = vdwg.mxu0
    %v1718 = vadd.f32 %v1713, %v1653
    %v1719 = vadd.f32 %v1716, %v1654
    %v1720 = vsel %vm46, %v1718, 0.0
    %1721 = vadd.xlane.f32.xlu0 %v1720
    %v1722 = vpop.xlane.xlu0 %1721
    %v1723 = vsel %vm46, %v1719, 0.0
    %1724 = vadd.xlane.f32.xlu0 %v1723
    %v1725 = vpop.xlane.xlu0 %1724
    %v1726 = vmul.f32 %v1722, %v810
    %v1727 = vmul.f32 %v1725, %v810
    %v1728 = vsub.f32 %v1718, %v1726
    %v1729 = vsub.f32 %v1719, %v1727
    %v1730 = vmul.f32 %v1728, %v1728
    %v1731 = vmul.f32 %v1729, %v1729
    %v1732 = vsel %vm46, %v1730, 0.0
    %1733 = vadd.xlane.f32.xlu0 %v1732
    %v1734 = vpop.xlane.xlu0 %1733
    %v1735 = vsel %vm46, %v1731, 0.0
    %1736 = vadd.xlane.f32.xlu0 %v1735
    %v1737 = vpop.xlane.xlu0 %1736
    %v1738 = vmul.f32 %v1734, %v810
    %v1739 = vmul.f32 %v1737, %v810
    %v1740 = vadd.f32 %v1738, 1e-05
    %v1741 = vadd.f32 %v1739, 1e-05
    %v1742 = vrsqrt.pop %v1740
    %v1743 = vmul.f32 %v1742, %v1740
    %v1744 = vmul.f32 %v1743, %v1742
    %v1745 = vmul.f32 0.5, %v1744
    %v1746 = vsub.f32 1.5, %v1745
    %v1747 = vmul.f32 %v1742, %v1746
    %vm1748 = vweird.f32 %v1740
    %vm1749 = vweird.f32 %v1742
    %vm1750 = vmor %vm1748, %vm1749
    %v1751 = vsel %vm1750, %v1742, %v1747
    %v1752 = vrsqrt.pop %v1741
    %v1753 = vmul.f32 %v1752, %v1741
    %v1754 = vmul.f32 %v1753, %v1752
    %v1755 = vmul.f32 0.5, %v1754
    %v1756 = vsub.f32 1.5, %v1755
    %v1757 = vmul.f32 %v1752, %v1756
    %vm1758 = vweird.f32 %v1741
    %vm1759 = vweird.f32 %v1752
    %vm1760 = vmor %vm1758, %vm1759
    %v1761 = vsel %vm1760, %v1752, %v1757
    %v1762 = vmul.f32 %v1728, %v1751
    %v1763 = vmul.f32 %v1729, %v1761
    %v1764 = vperm.slane %v43, 7
    %v1765 = vmul.f32 %v1762, %v1764
    %v1766 = vmul.f32 %v1763, %v1764
    %v1767 = vperm.slane %v44, 0
    %v1768 = vadd.f32 %v1765, %v1767
    %v1769 = vadd.f32 %v1766, %v1767
    %1770 = vst.msk [vmem:[#allocation2] sm:$0xff] %vm46, %v1768
    %1771 = vst.msk [vmem:[#allocation2 + $0x8] sm:$0xff] %vm46, %v1769
    // Predicated region
    $region22: #{decoder_layer.1} parent=1 // pred_check
      _
    $region23: #{decoder_layer.1} parent=1 // pred_check_branch
      %1773 = sbr.rel (0) target = $region25
    $region24: #{decoder_layer.1} parent=1 // pred_region
      %1775 = vsyncadd [#allocation3], 0
      %s1776 = sshll.u32 [#allocation2], 4
      %s1777 = int_to_ptr.vmem [resolvable:$true] %s1776
      %s1778 = sshll.u32 %s5, 4
      %s1779 = int_to_ptr.hbm [resolvable:$true] %s1778
      %1784 = dma.vmem_to_hbm [thread:$0]  %s1777, 256, %s1779, [#allocation3], 128, 128, 8
    $region25: #{decoder_layer.1} parent=1 // pred_fallthru
      _
    // Predicated region
    $region26: #{decoder_layer.1} parent=1 // pred_check
      _
    $region27: #{decoder_layer.1} parent=1 // pred_check_branch
      %1786 = sbr.rel (0) target = $region29
    $region28: #{decoder_layer.1} parent=1 // pred_region
      %1788 = dma.done [#allocation3], 256
    $region29: #{decoder_layer.1} parent=1 // pred_fallthru
      _
    %1789 = vsyncpa [#allocation3], 1

</llo_original>
